<compile_context>
chip_gen: v6e
topology: v6e:2x2x1
jax: 0.10.0
libtpu: 0.0.40
codegen_flags: <defaults>
</compile_context>

<pallas_src>
import functools
import math

import jax
import jax.numpy as jnp
from jax.experimental import pallas as pl
from jax.experimental.pallas import tpu as pltpu


_LANE = 128           # TPU lane width: pad trailing dims to a multiple of this.
_MAX_TILE_ROWS = 256  # rows of `hidden` processed per grid step.


def _round_up(x, m):
    return ((x + m - 1) // m) * m


def _spec(shape, index_map, n_buffers):
    """BlockSpec with an explicit pipeline buffer count.

    Falls back to a plain BlockSpec if this jax version does not expose
    `pl.Buffered` / the `pipeline_mode` kwarg.
    """
    if hasattr(pl, "Buffered"):
        try:
            return pl.BlockSpec(shape, index_map, pipeline_mode=pl.Buffered(n_buffers))
        except TypeError:
            pass
    return pl.BlockSpec(shape, index_map)


def _ff1_kernel(h_ref, w1_ref, b1_ref, w2_ref, b2_ref, out_ref):
    """Fused per-tile body: out = tanh(tanh(h @ W1 + b1) @ W2 + b2).

    h_ref  : (TR, H)   streamed rows of hidden states
    w1_ref : (H, Mp)   resident; mid dim zero-padded to a multiple of 128
    b1_ref : (1, Mp)
    w2_ref : (Mp, Hp)  resident; zero-padded on both dims
    b2_ref : (1, Hp)
    out_ref: (TR, Hp)  lane-dense (Hp % 128 == 0) -> unmasked stores
    """
    h = h_ref[...]
    y1 = jnp.tanh(
        jnp.dot(h, w1_ref[...], preferred_element_type=jnp.float32) + b1_ref[...]
    )
    y2 = jnp.dot(y1, w2_ref[...], preferred_element_type=jnp.float32) + b2_ref[...]
    out_ref[...] = jnp.tanh(y2).astype(out_ref.dtype)


@functools.partial(jax.jit, static_argnames=("use_buffered",))
def _ff1_forward_impl(hidden, w1, b1, w2, b2, *, use_buffered=True):
    H = hidden.shape[-1]
    M = w1.shape[1]
    assert w1.shape == (H, M), (w1.shape, H, M)
    assert w2.shape == (M, H), (w2.shape, M, H)

    Mp = _round_up(M, _LANE)
    Hp = _round_up(H, _LANE)

    # Zero-pad weights/biases to lane-aligned widths. Exact: tanh(0) == 0 and
    # the padded rows/cols of W2 are zero, so padded outputs are 0 and dropped.
    w1p = jnp.pad(w1, ((0, 0), (0, Mp - M)))
    b1p = jnp.pad(b1.reshape(1, M), ((0, 0), (0, Mp - M)))
    w2p = jnp.pad(w2, ((0, Mp - M), (0, Hp - H)))
    b2p = jnp.pad(b2.reshape(1, H), ((0, 0), (0, Hp - H)))

    # Flatten all leading dims into rows; stream them tile-by-tile on one grid axis.
    lead_shape = hidden.shape[:-1]
    rows = math.prod(lead_shape) if lead_shape else 1
    h2d = hidden.reshape(rows, H)

    tile_rows = min(_MAX_TILE_ROWS, _round_up(rows, 8))
    rows_pad = _round_up(rows, tile_rows)
    h2d = jnp.pad(h2d, ((0, rows_pad - rows), (0, 0)))
    n_tiles = rows_pad // tile_rows

    if use_buffered:
        in_specs = [
            _spec((tile_rows, H), lambda i: (i, 0), 2),  # streamed hidden rows
            _spec((H, Mp), lambda i: (0, 0), 1),         # resident weights: single buffer
            _spec((1, Mp), lambda i: (0, 0), 1),
            _spec((Mp, Hp), lambda i: (0, 0), 1),
            _spec((1, Hp), lambda i: (0, 0), 1),
        ]
    else:
        in_specs = [
            pl.BlockSpec((tile_rows, H), lambda i: (i, 0)),
            pl.BlockSpec((H, Mp), lambda i: (0, 0)),
            pl.BlockSpec((1, Mp), lambda i: (0, 0)),
            pl.BlockSpec((Mp, Hp), lambda i: (0, 0)),
            pl.BlockSpec((1, Hp), lambda i: (0, 0)),
        ]

    out_pad = pl.pallas_call(
        _ff1_kernel,
        out_shape=jax.ShapeDtypeStruct((rows_pad, Hp), hidden.dtype),
        grid_spec=pltpu.PrefetchScalarGridSpec(
            num_scalar_prefetch=0,
            grid=(n_tiles,),
            in_specs=in_specs,
            out_specs=pl.BlockSpec((tile_rows, Hp), lambda i: (i, 0)),
        ),
        compiler_params=pltpu.CompilerParams(
            # Independent row tiles: shard across TensorCores on v7x.
            dimension_semantics=("parallel",),
        ),
    )(h2d, w1p, b1p, w2p, b2p)

    out = out_pad[:rows, :H]
    return out.reshape(*lead_shape, H) if lead_shape else out.reshape(H)


def ff1_forward(x_input, t, hidden, w1, b1, w2, b2):
    """FF1.forward equivalent. `x_input` and `t` are accepted for signature
    parity with the PyTorch module but are ignored (as in the reference).
    `hidden` may be (B, H) or have extra leading batch/eval dims, e.g.
    (num_evals, B, H); all evaluations run in a single pallas_call."""
    del x_input, t  # unused by FF1.forward, kept for parity
    try:
        return _ff1_forward_impl(hidden, w1, b1, w2, b2, use_buffered=True)
    except Exception:
        # Fallback for jax versions where pipeline_mode / Buffered(1) is not
        # supported by the TPU lowering: plain (double-buffered) BlockSpecs.
        return _ff1_forward_impl(hidden, w1, b1, w2, b2, use_buffered=False)


def make_ff1_params(key, hidden_dim):
    """Deterministic params matching FF1.__init__: weight ~ N(0, 0.1), bias = 0.
    Weights are stored as (in_features, out_features)."""
    mid_dim = max(hidden_dim * 2, 50)
    k1, k2 = jax.random.split(key)
    w1 = jax.random.normal(k1, (hidden_dim, mid_dim), dtype=jnp.float32) * 0.1
    b1 = jnp.zeros((mid_dim,), dtype=jnp.float32)
    w2 = jax.random.normal(k2, (mid_dim, hidden_dim), dtype=jnp.float32) * 0.1
    b2 = jnp.zeros((hidden_dim,), dtype=jnp.float32)
    return w1, b1, w2, b2


if __name__ == "__main__":
    key = jax.random.PRNGKey(0)
    k_param, k_hidden, k_input = jax.random.split(key, 3)

    batch = 8
    hidden_dim = 32
    feature_dim = 16   # accepted by forward() but unused, as in the PyTorch module
    num_evals = 64     # many independent forward evals batched into one pallas_call

    w1, b1, w2, b2 = make_ff1_params(k_param, hidden_dim)

    hidden = jax.random.normal(
        k_hidden, (num_evals, batch, hidden_dim), dtype=jnp.float32)
    x_input = jax.random.normal(
        k_input, (num_evals, batch, feature_dim), dtype=jnp.float32)
    t = jnp.float32(0.0)

    # Batched (amortized) evaluation: 512 hidden rows streamed through one kernel.
    out = ff1_forward(x_input, t, hidden, w1, b1, w2, b2)
    out = jax.block_until_ready(out)

    ref = jnp.tanh(jnp.tanh(hidden @ w1 + b1) @ w2 + b2)
    assert out.shape == (num_evals, batch, hidden_dim)
    assert jnp.allclose(out, ref, atol=1e-5, rtol=1e-5)

    # Single (B, H) call, matching the original module's usage pattern.
    out1 = ff1_forward(x_input[0], t, hidden[0], w1, b1, w2, b2)
    out1 = jax.block_until_ready(out1)
    ref1 = jnp.tanh(jnp.tanh(hidden[0] @ w1 + b1) @ w2 + b2)
    assert out1.shape == (batch, hidden_dim)
    assert jnp.allclose(out1, ref1, atol=1e-5, rtol=1e-5)

    print("KERNEL_OK")
</pallas_src>

<mosaic_0001>
module attributes {stable_mosaic.version = 11 : i64} {
  func.func @_ff1_kernel(%arg0: i32, %arg1: memref<256x32xf32, #tpu.memory_space<vmem>>, %arg2: memref<32x128xf32, #tpu.memory_space<vmem>>, %arg3: memref<1x128xf32, #tpu.memory_space<vmem>>, %arg4: memref<128x128xf32, #tpu.memory_space<vmem>>, %arg5: memref<1x128xf32, #tpu.memory_space<vmem>>, %arg6: memref<256x128xf32, #tpu.memory_space<vmem>>) attributes {dimension_semantics = [#tpu.dimension_semantics<parallel>], iteration_bounds = array<i64: 2>, scalar_prefetch = 0 : i64, scratch_operands = 0 : i64, tpu.core_type = #tpu.core_type<tc>, window_params = [{pipeline_mode = #tpu.pipeline_mode<double_buffered>, transform_indices = @transform_0, window_bounds = array<i64: 256, 32>}, {pipeline_mode = #tpu.pipeline_mode<synchronous>, transform_indices = @transform_1, window_bounds = array<i64: 32, 128>}, {pipeline_mode = #tpu.pipeline_mode<synchronous>, transform_indices = @transform_2, window_bounds = array<i64: 1, 128>}, {pipeline_mode = #tpu.pipeline_mode<synchronous>, transform_indices = @transform_3, window_bounds = array<i64: 128, 128>}, {pipeline_mode = #tpu.pipeline_mode<synchronous>, transform_indices = @transform_4, window_bounds = array<i64: 1, 128>}, {transform_indices = @transform_5, window_bounds = array<i64: 256, 128>}]} {
    %c0 = arith.constant 0 : index
    %c0_0 = arith.constant 0 : index
    %0 = vector.load %arg1[%c0, %c0_0] : memref<256x32xf32, #tpu.memory_space<vmem>>, vector<256x32xf32>
    %c0_1 = arith.constant 0 : index
    %c0_2 = arith.constant 0 : index
    %1 = vector.load %arg2[%c0_1, %c0_2] : memref<32x128xf32, #tpu.memory_space<vmem>>, vector<32x128xf32>
    %cst = arith.constant dense<0.000000e+00> : vector<256x128xf32>
    %2 = tpu.matmul %0, %1, %cst {dimension_numbers = #tpu.dot_dimension_numbers<[1], [0], [0], [1], [0, 0, 1, 1], [], []>} : vector<256x32xf32>, vector<32x128xf32>, vector<256x128xf32> -> vector<256x128xf32>
    %c0_3 = arith.constant 0 : index
    %c0_4 = arith.constant 0 : index
    %3 = vector.load %arg3[%c0_3, %c0_4] : memref<1x128xf32, #tpu.memory_space<vmem>>, vector<1x128xf32>
    %4 = vector.broadcast %3 : vector<1x128xf32> to vector<256x128xf32>
    %5 = arith.addf %2, %4 : vector<256x128xf32>
    %6 = math.tanh %5 : vector<256x128xf32>
    %c0_5 = arith.constant 0 : index
    %c0_6 = arith.constant 0 : index
    %7 = vector.load %arg4[%c0_5, %c0_6] : memref<128x128xf32, #tpu.memory_space<vmem>>, vector<128x128xf32>
    %cst_7 = arith.constant dense<0.000000e+00> : vector<256x128xf32>
    %8 = tpu.matmul %6, %7, %cst_7 {dimension_numbers = #tpu.dot_dimension_numbers<[1], [0], [0], [1], [0, 0, 1, 1], [], []>} : vector<256x128xf32>, vector<128x128xf32>, vector<256x128xf32> -> vector<256x128xf32>
    %c0_8 = arith.constant 0 : index
    %c0_9 = arith.constant 0 : index
    %9 = vector.load %arg5[%c0_8, %c0_9] : memref<1x128xf32, #tpu.memory_space<vmem>>, vector<1x128xf32>
    %10 = vector.broadcast %9 : vector<1x128xf32> to vector<256x128xf32>
    %11 = arith.addf %8, %10 : vector<256x128xf32>
    %12 = math.tanh %11 : vector<256x128xf32>
    %c0_10 = arith.constant 0 : index
    %c0_11 = arith.constant 0 : index
    %13 = vector.load %arg6[%c0_10, %c0_11] : memref<256x128xf32, #tpu.memory_space<vmem>>, vector<256x128xf32>
    tpu.vector_store %arg6[%c0_10, %c0_11], %12 {strides = array<i32>} : memref<256x128xf32, #tpu.memory_space<vmem>>, vector<256x128xf32>,
    return
  }
  func.func @transform_0(%arg0: i32) -> (i32, i32) {
    %c0_i32 = arith.constant 0 : i32
    %c0_i32_0 = arith.constant 0 : i32
    return %arg0, %c0_i32 : i32, i32
  }
  func.func @transform_1(%arg0: i32) -> (i32, i32) {
    %c0_i32 = arith.constant 0 : i32
    %c0_i32_0 = arith.constant 0 : i32
    %c0_i32_1 = arith.constant 0 : i32
    return %c0_i32, %c0_i32_0 : i32, i32
  }
  func.func @transform_2(%arg0: i32) -> (i32, i32) {
    %c0_i32 = arith.constant 0 : i32
    %c0_i32_0 = arith.constant 0 : i32
    %c0_i32_1 = arith.constant 0 : i32
    return %c0_i32, %c0_i32_0 : i32, i32
  }
  func.func @transform_3(%arg0: i32) -> (i32, i32) {
    %c0_i32 = arith.constant 0 : i32
    %c0_i32_0 = arith.constant 0 : i32
    %c0_i32_1 = arith.constant 0 : i32
    return %c0_i32, %c0_i32_0 : i32, i32
  }
  func.func @transform_4(%arg0: i32) -> (i32, i32) {
    %c0_i32 = arith.constant 0 : i32
    %c0_i32_0 = arith.constant 0 : i32
    %c0_i32_1 = arith.constant 0 : i32
    return %c0_i32, %c0_i32_0 : i32, i32
  }
  func.func @transform_5(%arg0: i32) -> (i32, i32) {
    %c0_i32 = arith.constant 0 : i32
    %c0_i32_0 = arith.constant 0 : i32
    return %arg0, %c0_i32 : i32, i32
  }
}

module attributes {stable_mosaic.version = 11 : i64} {
  func.func @_ff1_kernel(%arg0: i32, %arg1: memref<256x32xf32, #tpu.memory_space<vmem>>, %arg2: memref<32x128xf32, #tpu.memory_space<vmem>>, %arg3: memref<1x128xf32, #tpu.memory_space<vmem>>, %arg4: memref<128x128xf32, #tpu.memory_space<vmem>>, %arg5: memref<1x128xf32, #tpu.memory_space<vmem>>, %arg6: memref<256x128xf32, #tpu.memory_space<vmem>>) attributes {dimension_semantics = [#tpu.dimension_semantics<parallel>], iteration_bounds = array<i64: 2>, scalar_prefetch = 0 : i64, scratch_operands = 0 : i64, tpu.core_type = #tpu.core_type<tc>, window_params = [{transform_indices = @transform_0, window_bounds = array<i64: 256, 32>}, {pipeline_mode = #tpu.pipeline_mode<synchronous>, transform_indices = @transform_1, window_bounds = array<i64: 32, 128>}, {pipeline_mode = #tpu.pipeline_mode<synchronous>, transform_indices = @transform_2, window_bounds = array<i64: 1, 128>}, {pipeline_mode = #tpu.pipeline_mode<synchronous>, transform_indices = @transform_3, window_bounds = array<i64: 128, 128>}, {pipeline_mode = #tpu.pipeline_mode<synchronous>, transform_indices = @transform_4, window_bounds = array<i64: 1, 128>}, {transform_indices = @transform_5, window_bounds = array<i64: 256, 128>}]} {
    %c0 = arith.constant 0 : index
    %c0_0 = arith.constant 0 : index
    %0 = vector.load %arg1[%c0, %c0_0] : memref<256x32xf32, #tpu.memory_space<vmem>>, vector<256x32xf32>
    %c0_1 = arith.constant 0 : index
    %c0_2 = arith.constant 0 : index
    %1 = vector.load %arg2[%c0_1, %c0_2] : memref<32x128xf32, #tpu.memory_space<vmem>>, vector<32x128xf32>
    %cst = arith.constant dense<0.000000e+00> : vector<256x128xf32>
    %2 = tpu.matmul %0, %1, %cst {dimension_numbers = #tpu.dot_dimension_numbers<[1], [0], [0], [1], [0, 0, 1, 1], [], []>} : vector<256x32xf32>, vector<32x128xf32>, vector<256x128xf32> -> vector<256x128xf32>
    %c0_3 = arith.constant 0 : index
    %c0_4 = arith.constant 0 : index
    %3 = vector.load %arg3[%c0_3, %c0_4] : memref<1x128xf32, #tpu.memory_space<vmem>>, vector<1x128xf32>
    %4 = vector.broadcast %3 : vector<1x128xf32> to vector<256x128xf32>
    %5 = arith.addf %2, %4 : vector<256x128xf32>
    %6 = math.tanh %5 : vector<256x128xf32>
    %c0_5 = arith.constant 0 : index
    %c0_6 = arith.constant 0 : index
    %7 = vector.load %arg4[%c0_5, %c0_6] : memref<128x128xf32, #tpu.memory_space<vmem>>, vector<128x128xf32>
    %cst_7 = arith.constant dense<0.000000e+00> : vector<256x128xf32>
    %8 = tpu.matmul %6, %7, %cst_7 {dimension_numbers = #tpu.dot_dimension_numbers<[1], [0], [0], [1], [0, 0, 1, 1], [], []>} : vector<256x128xf32>, vector<128x128xf32>, vector<256x128xf32> -> vector<256x128xf32>
    %c0_8 = arith.constant 0 : index
    %c0_9 = arith.constant 0 : index
    %9 = vector.load %arg5[%c0_8, %c0_9] : memref<1x128xf32, #tpu.memory_space<vmem>>, vector<1x128xf32>
    %10 = vector.broadcast %9 : vector<1x128xf32> to vector<256x128xf32>
    %11 = arith.addf %8, %10 : vector<256x128xf32>
    %12 = math.tanh %11 : vector<256x128xf32>
    %c0_10 = arith.constant 0 : index
    %c0_11 = arith.constant 0 : index
    %13 = vector.load %arg6[%c0_10, %c0_11] : memref<256x128xf32, #tpu.memory_space<vmem>>, vector<256x128xf32>
    tpu.vector_store %arg6[%c0_10, %c0_11], %12 {strides = array<i32>} : memref<256x128xf32, #tpu.memory_space<vmem>>, vector<256x128xf32>,
    return
  }
  func.func @transform_0(%arg0: i32) -> (i32, i32) {
    %c0_i32 = arith.constant 0 : i32
    %c0_i32_0 = arith.constant 0 : i32
    return %arg0, %c0_i32 : i32, i32
  }
  func.func @transform_1(%arg0: i32) -> (i32, i32) {
    %c0_i32 = arith.constant 0 : i32
    %c0_i32_0 = arith.constant 0 : i32
    %c0_i32_1 = arith.constant 0 : i32
    return %c0_i32, %c0_i32_0 : i32, i32
  }
  func.func @transform_2(%arg0: i32) -> (i32, i32) {
    %c0_i32 = arith.constant 0 : i32
    %c0_i32_0 = arith.constant 0 : i32
    %c0_i32_1 = arith.constant 0 : i32
    return %c0_i32, %c0_i32_0 : i32, i32
  }
  func.func @transform_3(%arg0: i32) -> (i32, i32) {
    %c0_i32 = arith.constant 0 : i32
    %c0_i32_0 = arith.constant 0 : i32
    %c0_i32_1 = arith.constant 0 : i32
    return %c0_i32, %c0_i32_0 : i32, i32
  }
  func.func @transform_4(%arg0: i32) -> (i32, i32) {
    %c0_i32 = arith.constant 0 : i32
    %c0_i32_0 = arith.constant 0 : i32
    %c0_i32_1 = arith.constant 0 : i32
    return %c0_i32, %c0_i32_0 : i32, i32
  }
  func.func @transform_5(%arg0: i32) -> (i32, i32) {
    %c0_i32 = arith.constant 0 : i32
    %c0_i32_0 = arith.constant 0 : i32
    return %arg0, %c0_i32 : i32, i32
  }
}

</mosaic_0001>

<llo_original>
// kernel: _ff1_forward_impl.1
$region0: #{_ff1_forward_impl.1}
  #allocation0 [shape = 'u32[]', space=smem, size = 0x4, offset = 0x4, fixed_abs, tag = 'smem constant byte address 0x4 - core index']
  #allocation1 [shape = 'u32[144,128]{1,0:T(1,128)}', space=vmem, size = 0x12000, scoped, tag = 'internal scratch']
  %s0 = inlined_call_operand.vmem [shape: f32[512,32], index: 0, kind: input, shape index: {}]
  %s1 = inlined_call_operand.vmem [shape: f32[32,128], index: 1, kind: input, shape index: {}]
  %s2 = inlined_call_operand.vmem [shape: f32[1,128], index: 2, kind: input, shape index: {}]
  %s3 = inlined_call_operand.vmem [shape: f32[128,128], index: 3, kind: input, shape index: {}]
  %s4 = inlined_call_operand.vmem [shape: f32[1,128], index: 4, kind: input, shape index: {}]
  %s5 = inlined_call_operand.vmem [shape: f32[512,128], index: 5, kind: output, shape index: {}]
  %s6 = sld [smem:[#allocation0]]
  $region53: #{_ff1_forward_impl.1} parent=0
    _
  %s8 = ssub.s32 1, %s6
  %s9 = scalar_select 0, %s8, %s6
  loop: start=0, step=1, limit=4
  $region2: #{_ff1_forward_impl.1} parent=0 // loop_pre_header
    _
  $region3: #{_ff1_forward_impl.1} parent=0 // loop_header
    %s11 = sphi 0, %s15
    %p12 = scmp.ge.s32.totalorder %s11, 4
    %s21 = sphi 0, %s23
    %s24 = sphi 0, %s21
    %s25 = sphi 0, %s24
    %s41 = sphi 0, %s25
    %s45 = sphi 0, %s45
    %s47 = sphi 0, %s45
    %s48 = sphi 0, %s47
    %s62 = sphi 0, %s48
    %s66 = sphi 0, %s66
    %s68 = sphi 0, %s66
    %s69 = sphi 0, %s68
    %s83 = sphi 0, %s69
    %s87 = sphi 0, %s87
    %s89 = sphi 0, %s87
    %s90 = sphi 0, %s89
    %s104 = sphi 0, %s90
    %s108 = sphi 0, %s108
    %s110 = sphi 0, %s108
    %s111 = sphi 0, %s110
    %s125 = sphi 0, %s111
    %s131 = sphi 0, %s133
    %s134 = sphi 0, %s131
    %s135 = sphi 0, %s134
    %s151 = sphi 0, %s135
  $region4: #{_ff1_forward_impl.1} parent=0 // loop_header_branch
    %14 = sbr.rel (%p12) target = $region8
  $region5: #{_ff1_forward_impl.1} parent=0 // loop_body
    %s16 = ssub.s32 %s11, 1
    %s17 = ssub.s32 %s11, 2
    %s18 = sadd.s32 %s11, 1
    %s19 = ssub.s32 %s11, %s18
    %p20 = scmp.eq.s32.totalorder %s19, 0
    %s22 = sadd.s32 %s21, 1
    %s23 = scalar_select %p20, %s21, %s22
    %p26 = pneg %p20
    %p27 = scmp.eq.s32.totalorder %s11, 1
    %p28 = por %p26, %p27
    %p29 = scmp.ne.s32.totalorder %s21, %s24
    %p30 = scmp.eq.s32.totalorder %s11, 0
    %p31 = por %p29, %p30
    %p32 = scmp.ne.s32.totalorder %s21, %s24
    %p33 = scmp.eq.s32.totalorder %s16, 1
    %p34 = por %p32, %p33
    %p35 = scmp.ne.s32.totalorder %s24, %s25
    %p36 = scmp.eq.s32.totalorder %s16, 0
    %p37 = por %p35, %p36
    %p38 = scmp.ne.s32.totalorder %s24, %s25
    %p39 = scmp.eq.s32.totalorder %s17, 1
    %p40 = por %p38, %p39
    %p42 = scmp.ne.s32.totalorder %s25, %s41
    %p43 = scmp.eq.s32.totalorder %s17, 0
    %p44 = por %p42, %p43
    %s46 = sadd.s32 %s45, 1
    %p49 = scmp.eq.s32.totalorder %s11, 1
    %p50 = scmp.ne.s32.totalorder %s45, %s47
    %p51 = scmp.eq.s32.totalorder %s11, 0
    %p52 = por %p50, %p51
    %p53 = scmp.ne.s32.totalorder %s45, %s47
    %p54 = scmp.eq.s32.totalorder %s16, 1
    %p55 = por %p53, %p54
    %p56 = scmp.ne.s32.totalorder %s47, %s48
    %p57 = scmp.eq.s32.totalorder %s16, 0
    %p58 = por %p56, %p57
    %p59 = scmp.ne.s32.totalorder %s47, %s48
    %p60 = scmp.eq.s32.totalorder %s17, 1
    %p61 = por %p59, %p60
    %p63 = scmp.ne.s32.totalorder %s48, %s62
    %p64 = scmp.eq.s32.totalorder %s17, 0
    %p65 = por %p63, %p64
    %s67 = sadd.s32 %s66, 1
    %p70 = scmp.eq.s32.totalorder %s11, 1
    %p71 = scmp.ne.s32.totalorder %s66, %s68
    %p72 = scmp.eq.s32.totalorder %s11, 0
    %p73 = por %p71, %p72
    %p74 = scmp.ne.s32.totalorder %s66, %s68
    %p75 = scmp.eq.s32.totalorder %s16, 1
    %p76 = por %p74, %p75
    %p77 = scmp.ne.s32.totalorder %s68, %s69
    %p78 = scmp.eq.s32.totalorder %s16, 0
    %p79 = por %p77, %p78
    %p80 = scmp.ne.s32.totalorder %s68, %s69
    %p81 = scmp.eq.s32.totalorder %s17, 1
    %p82 = por %p80, %p81
    %p84 = scmp.ne.s32.totalorder %s69, %s83
    %p85 = scmp.eq.s32.totalorder %s17, 0
    %p86 = por %p84, %p85
    %s88 = sadd.s32 %s87, 1
    %p91 = scmp.eq.s32.totalorder %s11, 1
    %p92 = scmp.ne.s32.totalorder %s87, %s89
    %p93 = scmp.eq.s32.totalorder %s11, 0
    %p94 = por %p92, %p93
    %p95 = scmp.ne.s32.totalorder %s87, %s89
    %p96 = scmp.eq.s32.totalorder %s16, 1
    %p97 = por %p95, %p96
    %p98 = scmp.ne.s32.totalorder %s89, %s90
    %p99 = scmp.eq.s32.totalorder %s16, 0
    %p100 = por %p98, %p99
    %p101 = scmp.ne.s32.totalorder %s89, %s90
    %p102 = scmp.eq.s32.totalorder %s17, 1
    %p103 = por %p101, %p102
    %p105 = scmp.ne.s32.totalorder %s90, %s104
    %p106 = scmp.eq.s32.totalorder %s17, 0
    %p107 = por %p105, %p106
    %s109 = sadd.s32 %s108, 1
    %p112 = scmp.eq.s32.totalorder %s11, 1
    %p113 = scmp.ne.s32.totalorder %s108, %s110
    %p114 = scmp.eq.s32.totalorder %s11, 0
    %p115 = por %p113, %p114
    %p116 = scmp.ne.s32.totalorder %s108, %s110
    %p117 = scmp.eq.s32.totalorder %s16, 1
    %p118 = por %p116, %p117
    %p119 = scmp.ne.s32.totalorder %s110, %s111
    %p120 = scmp.eq.s32.totalorder %s16, 0
    %p121 = por %p119, %p120
    %p122 = scmp.ne.s32.totalorder %s110, %s111
    %p123 = scmp.eq.s32.totalorder %s17, 1
    %p124 = por %p122, %p123
    %p126 = scmp.ne.s32.totalorder %s111, %s125
    %p127 = scmp.eq.s32.totalorder %s17, 0
    %p128 = por %p126, %p127
    %s129 = ssub.s32 %s11, %s18
    %p130 = scmp.eq.s32.totalorder %s129, 0
    %s132 = sadd.s32 %s131, 1
    %s133 = scalar_select %p130, %s131, %s132
    %p136 = pneg %p130
    %p137 = scmp.eq.s32.totalorder %s11, 1
    %p138 = por %p136, %p137
    %p139 = scmp.ne.s32.totalorder %s131, %s134
    %p140 = scmp.eq.s32.totalorder %s11, 0
    %p141 = por %p139, %p140
    %p142 = scmp.ne.s32.totalorder %s131, %s134
    %p143 = scmp.eq.s32.totalorder %s16, 1
    %p144 = por %p142, %p143
    %p145 = scmp.ne.s32.totalorder %s134, %s135
    %p146 = scmp.eq.s32.totalorder %s16, 0
    %p147 = por %p145, %p146
    %p148 = scmp.ne.s32.totalorder %s134, %s135
    %p149 = scmp.eq.s32.totalorder %s17, 1
    %p150 = por %p148, %p149
    %p152 = scmp.ne.s32.totalorder %s135, %s151
    %p153 = scmp.eq.s32.totalorder %s17, 0
    %p154 = por %p152, %p153
    %p155 = scmp.le.s32.totalorder 1, %s11
    %p156 = scmp.lt.s32.totalorder %s11, 3
    %p157 = pnand %p155, %p156
    %p158 = pneg %p157
    // Predicated region
    $region9: #{_ff1_forward_impl.1} parent=5 // pred_check
      _
    $region10: #{_ff1_forward_impl.1} parent=5 // pred_check_branch
      %160 = sbr.rel (%p157) target = $region12
    $region11: #{_ff1_forward_impl.1} parent=5 // pred_region
      %s161 = ssub.s32 %s11, 1
      // Predicated region
      $region13: #{_ff1_forward_impl.1} parent=11 // pred_check
        %p162 = pneg %p58
      $region14: #{_ff1_forward_impl.1} parent=11 // pred_check_branch
        %164 = sbr.rel (%p162) target = $region16
      $region15: #{_ff1_forward_impl.1} parent=11 // pred_region
        _
      $region16: #{_ff1_forward_impl.1} parent=11 // pred_fallthru
        _
      // Predicated region
      $region17: #{_ff1_forward_impl.1} parent=11 // pred_check
        %p165 = pneg %p79
      $region18: #{_ff1_forward_impl.1} parent=11 // pred_check_branch
        %167 = sbr.rel (%p165) target = $region20
      $region19: #{_ff1_forward_impl.1} parent=11 // pred_region
        _
      $region20: #{_ff1_forward_impl.1} parent=11 // pred_fallthru
        _
      // Predicated region
      $region21: #{_ff1_forward_impl.1} parent=11 // pred_check
        %p168 = pneg %p100
      $region22: #{_ff1_forward_impl.1} parent=11 // pred_check_branch
        %170 = sbr.rel (%p168) target = $region24
      $region23: #{_ff1_forward_impl.1} parent=11 // pred_region
        _
      $region24: #{_ff1_forward_impl.1} parent=11 // pred_fallthru
        _
      // Predicated region
      $region25: #{_ff1_forward_impl.1} parent=11 // pred_check
        %p171 = pneg %p121
      $region26: #{_ff1_forward_impl.1} parent=11 // pred_check_branch
        %173 = sbr.rel (%p171) target = $region28
      $region27: #{_ff1_forward_impl.1} parent=11 // pred_region
        _
      $region28: #{_ff1_forward_impl.1} parent=11 // pred_fallthru
        _
    $region12: #{_ff1_forward_impl.1} parent=5 // pred_fallthru
      _
    %p174 = scmp.lt.s32.totalorder %s11, 2
    // Predicated region
    $region29: #{_ff1_forward_impl.1} parent=5 // pred_check
      %p175 = pneg %p174
    $region30: #{_ff1_forward_impl.1} parent=5 // pred_check_branch
      %177 = sbr.rel (%p175) target = $region32
    $region31: #{_ff1_forward_impl.1} parent=5 // pred_region
      // Predicated region
      $region33: #{_ff1_forward_impl.1} parent=31 // pred_check
        %p178 = pneg %p31
      $region34: #{_ff1_forward_impl.1} parent=31 // pred_check_branch
        %180 = sbr.rel (%p178) target = $region36
      $region35: #{_ff1_forward_impl.1} parent=31 // pred_region
        %s181 = smul.u32 32, %s11
        %p182 = scmp.lt.s32.totalorder %s181, 63
        %s183 = scalar_select %p182, %s181, 63
        %s184 = smul.addr %s183, 8
        %s185 = scalar_lea.vmem %s0, %s184
        %s186 = smul.u32 32, %s11
      $region36: #{_ff1_forward_impl.1} parent=31 // pred_fallthru
        _
    $region32: #{_ff1_forward_impl.1} parent=5 // pred_fallthru
      _
    %p187 = scmp.le.s32.totalorder 1, %s11
    %p188 = scmp.lt.s32.totalorder %s11, 3
    %p189 = pnand %p187, %p188
    %p190 = pneg %p189
    // Predicated region
    $region37: #{_ff1_forward_impl.1} parent=5 // pred_check
      _
    $region38: #{_ff1_forward_impl.1} parent=5 // pred_check_branch
      %192 = sbr.rel (%p189) target = $region40
    $region39: #{_ff1_forward_impl.1} parent=5 // pred_region
      %s193 = ssub.s32 %s11, 1
      %s194 = smul.u32 32, %s16
      %p195 = scmp.lt.s32.totalorder %s194, 63
      %s196 = scalar_select %p195, %s194, 63
      %s197 = smul.addr %s196, 8
      %s198 = scalar_lea.vmem %s0, %s197
      %p199 = pneg %p37
      %p200 = pneg %p34
      %p201 = pneg %p58
      %p202 = pneg %p55
      %p203 = pneg %p79
      %p204 = pneg %p76
      %p205 = pneg %p100
      %p206 = pneg %p97
      %p207 = pneg %p121
      %p208 = pneg %p118
      %p209 = pneg %p147
      %p210 = pneg %p144
      %s211 = smul.u32 32, %s16
      %p212 = scmp.lt.s32.totalorder %s211, 63
      %s213 = scalar_select %p212, %s211, 63
      %s214 = smul.addr %s213, 8
      %s215 = scalar_lea.vmem %s5, %s214
      %s216 = smul.u32 32, %s16
      %p217 = scmp.lt.s32.totalorder %s216, 63
      %s218 = scalar_select %p217, %s216, 63
      %s219 = smul.addr %s218, 8
      %s220 = scalar_lea.vmem %s0, %s219
      %s221 = smul.u32 32, %s16
      %s222 = smul.u32 32, %s16
      %p223 = scmp.lt.s32.totalorder %s222, 63
      %s224 = scalar_select %p223, %s222, 63
      %s225 = smul.addr %s224, 8
      %s226 = scalar_lea.vmem %s5, %s225
      %s227 = smul.u32 32, %s16
      %v228 = vld [vmem:[%s220] sm:$0xff]
      %v229 = vld [vmem:[%s220 + $0x8] sm:$0xff]
      %v230 = vld [vmem:[%s220 + $0x10] sm:$0xff]
      %v231 = vld [vmem:[%s220 + $0x18] sm:$0xff]
      %v232 = vld [vmem:[%s220 + $0x20] sm:$0xff]
      %v233 = vld [vmem:[%s220 + $0x28] sm:$0xff]
      %v234 = vld [vmem:[%s220 + $0x30] sm:$0xff]
      %v235 = vld [vmem:[%s220 + $0x38] sm:$0xff]
      %v236 = vld [vmem:[%s220 + $0x40] sm:$0xff]
      %v237 = vld [vmem:[%s220 + $0x48] sm:$0xff]
      %v238 = vld [vmem:[%s220 + $0x50] sm:$0xff]
      %v239 = vld [vmem:[%s220 + $0x58] sm:$0xff]
      %v240 = vld [vmem:[%s220 + $0x60] sm:$0xff]
      %v241 = vld [vmem:[%s220 + $0x68] sm:$0xff]
      %v242 = vld [vmem:[%s220 + $0x70] sm:$0xff]
      %v243 = vld [vmem:[%s220 + $0x78] sm:$0xff]
      %v244 = vld [vmem:[%s220 + $0x80] sm:$0xff]
      %v245 = vld [vmem:[%s220 + $0x88] sm:$0xff]
      %v246 = vld [vmem:[%s220 + $0x90] sm:$0xff]
      %v247 = vld [vmem:[%s220 + $0x98] sm:$0xff]
      %v248 = vld [vmem:[%s220 + $0xa0] sm:$0xff]
      %v249 = vld [vmem:[%s220 + $0xa8] sm:$0xff]
      %v250 = vld [vmem:[%s220 + $0xb0] sm:$0xff]
      %v251 = vld [vmem:[%s220 + $0xb8] sm:$0xff]
      %v252 = vld [vmem:[%s220 + $0xc0] sm:$0xff]
      %v253 = vld [vmem:[%s220 + $0xc8] sm:$0xff]
      %v254 = vld [vmem:[%s220 + $0xd0] sm:$0xff]
      %v255 = vld [vmem:[%s220 + $0xd8] sm:$0xff]
      %v256 = vld [vmem:[%s220 + $0xe0] sm:$0xff]
      %v257 = vld [vmem:[%s220 + $0xe8] sm:$0xff]
      %v258 = vld [vmem:[%s220 + $0xf0] sm:$0xff]
      %v259 = vld [vmem:[%s220 + $0xf8] sm:$0xff]
      %v260 = vld [vmem:[%s1] sm:$0xff]
      %v261 = vld [vmem:[%s1 + $0x8] sm:$0xff]
      %v262 = vld [vmem:[%s1 + $0x10] sm:$0xff]
      %v263 = vld [vmem:[%s1 + $0x18] sm:$0xff]
      %v264 = vld [vmem:[%s2] sm:$0x1]
      %v266 = vlaneseq
      %v267 = vshrl.u32 %v266, 7
      %v268 = vsub.s32 0, %v267
      %v269 = vrot.slane %v264, %v268
      %vm271 = vcmask 261120
      %v273 = vsel %vm271, %v228, 0
      %v276 = vsel %vm271, %v229, 0
      %v279 = vsel %vm271, %v230, 0
      %v282 = vsel %vm271, %v231, 0
      %v285 = vsel %vm271, %v232, 0
      %v288 = vsel %vm271, %v233, 0
      %v291 = vsel %vm271, %v234, 0
      %v294 = vsel %vm271, %v235, 0
      %v297 = vsel %vm271, %v236, 0
      %v300 = vsel %vm271, %v237, 0
      %v303 = vsel %vm271, %v238, 0
      %v306 = vsel %vm271, %v239, 0
      %v309 = vsel %vm271, %v240, 0
      %v312 = vsel %vm271, %v241, 0
      %v315 = vsel %vm271, %v242, 0
      %v318 = vsel %vm271, %v243, 0
      %v321 = vsel %vm271, %v244, 0
      %v324 = vsel %vm271, %v245, 0
      %v327 = vsel %vm271, %v246, 0
      %v330 = vsel %vm271, %v247, 0
      %v333 = vsel %vm271, %v248, 0
      %v336 = vsel %vm271, %v249, 0
      %v339 = vsel %vm271, %v250, 0
      %v342 = vsel %vm271, %v251, 0
      %v345 = vsel %vm271, %v252, 0
      %v348 = vsel %vm271, %v253, 0
      %v351 = vsel %vm271, %v254, 0
      %v354 = vsel %vm271, %v255, 0
      %v357 = vsel %vm271, %v256, 0
      %v360 = vsel %vm271, %v257, 0
      %v363 = vsel %vm271, %v258, 0
      %v366 = vsel %vm271, %v259, 0
      %368 = vmatprep.subr.mxu0 0.0
      %369 = vmatpush1.msra.mxu0 0.0
      %370 = vmatprep.subr.mxu0 0.0
      %371 = vmatpush1.msra.mxu0 0.0
      %372 = vmatprep.subr.mxu0 0.0
      %373 = vmatpush1.msra.mxu0 0.0
      %374 = vmatprep.subr.mxu0 0.0
      %375 = vmatpush1.msra.mxu0 0.0
      %376 = vmatprep.subr.mxu0 0.0
      %377 = vmatpush1.msra.mxu0 0.0
      %378 = vmatprep.subr.mxu0 0.0
      %379 = vmatpush1.msra.mxu0 0.0
      %380 = vmatprep.subr.mxu0 0.0
      %381 = vmatpush1.msra.mxu0 0.0
      %382 = vmatprep.subr.mxu0 0.0
      %383 = vmatpush1.msra.mxu0 0.0
      %384 = vmatprep.subr.mxu0 0.0
      %385 = vmatpush1.msra.mxu0 0.0
      %386 = vmatprep.subr.mxu0 0.0
      %387 = vmatpush1.msra.mxu0 0.0
      %388 = vmatprep.subr.mxu0 0.0
      %389 = vmatpush1.msra.mxu0 0.0
      %390 = vmatprep.subr.mxu0 0.0
      %391 = vmatpush1.msra.mxu0 0.0
      %392 = vmatprep.subr.mxu0 0.0
      %393 = vmatpush1.msra.mxu0 %v263
      %394 = vmatprep.subr.mxu0 0.0
      %395 = vmatpush1.msra.mxu0 %v262
      %396 = vmatprep.subr.mxu0 0.0
      %397 = vmatpush1.msra.mxu0 %v261
      %398 = vmatprep.subr.mxu0 0.0
      %399 = vmatpush1.msra.mxu0 %v260
      %400 = vmatprep.subr.mxu0 0.0
      %401 = vmatpush2.msra.mxu0 0.0
      %402 = vmatprep.subr.mxu0 0.0
      %403 = vmatpush2.msra.mxu0 0.0
      %404 = vmatprep.subr.mxu0 0.0
      %405 = vmatpush2.msra.mxu0 0.0
      %406 = vmatprep.subr.mxu0 0.0
      %407 = vmatpush2.msra.mxu0 0.0
      %408 = vmatprep.subr.mxu0 0.0
      %409 = vmatpush2.msra.mxu0 0.0
      %410 = vmatprep.subr.mxu0 0.0
      %411 = vmatpush2.msra.mxu0 0.0
      %412 = vmatprep.subr.mxu0 0.0
      %413 = vmatpush2.msra.mxu0 0.0
      %414 = vmatprep.subr.mxu0 0.0
      %415 = vmatpush2.msra.mxu0 0.0
      %416 = vmatprep.subr.mxu0 0.0
      %417 = vmatpush2.msra.mxu0 0.0
      %418 = vmatprep.subr.mxu0 0.0
      %419 = vmatpush2.msra.mxu0 0.0
      %420 = vmatprep.subr.mxu0 0.0
      %421 = vmatpush2.msra.mxu0 0.0
      %422 = vmatprep.subr.mxu0 0.0
      %423 = vmatpush2.msra.mxu0 0.0
      %424 = vmatprep.subr.mxu0 0.0
      %425 = vmatpush2.msra.mxu0 0.0
      %426 = vmatprep.subr.mxu0 0.0
      %427 = vmatpush2.msra.mxu0 0.0
      %428 = vmatprep.subr.mxu0 0.0
      %429 = vmatpush2.msra.mxu0 0.0
      %430 = vmatprep.subr.mxu0 0.0
      %431 = vmatpush2.msra.mxu0 0.0
      %432 = vmatprep.mubr.f32.mxu0 0.0
      %433 = vmatmul.mubr.f32.gmra.mxu0 %v273
      %v434 = vpop.f32.mrf.mxu0
      %v435 = vadd.f32 %v269, %v434
      %v436 = vpop.f32.mrf.mxu0
      %437 = vmatprep.mubr.f32.mxu0 0.0
      %438 = vmatmul.mubr.f32.gmra.mxu0 %v276
      %v439 = vpop.f32.mrf.mxu0
      %v440 = vadd.f32 %v269, %v439
      %v441 = vpop.f32.mrf.mxu0
      %442 = vmatprep.mubr.f32.mxu0 0.0
      %443 = vmatmul.mubr.f32.gmra.mxu0 %v279
      %v444 = vpop.f32.mrf.mxu0
      %v445 = vadd.f32 %v269, %v444
      %v446 = vpop.f32.mrf.mxu0
      %447 = vmatprep.mubr.f32.mxu0 0.0
      %448 = vmatmul.mubr.f32.gmra.mxu0 %v282
      %v449 = vpop.f32.mrf.mxu0
      %v450 = vadd.f32 %v269, %v449
      %v451 = vpop.f32.mrf.mxu0
      %452 = vmatprep.mubr.f32.mxu0 0.0
      %453 = vmatmul.mubr.f32.gmra.mxu0 %v285
      %v454 = vpop.f32.mrf.mxu0
      %v455 = vadd.f32 %v269, %v454
      %v456 = vpop.f32.mrf.mxu0
      %457 = vmatprep.mubr.f32.mxu0 0.0
      %458 = vmatmul.mubr.f32.gmra.mxu0 %v288
      %v459 = vpop.f32.mrf.mxu0
      %v460 = vadd.f32 %v269, %v459
      %v461 = vpop.f32.mrf.mxu0
      %462 = vmatprep.mubr.f32.mxu0 0.0
      %463 = vmatmul.mubr.f32.gmra.mxu0 %v291
      %v464 = vpop.f32.mrf.mxu0
      %v465 = vadd.f32 %v269, %v464
      %v466 = vpop.f32.mrf.mxu0
      %467 = vmatprep.mubr.f32.mxu0 0.0
      %468 = vmatmul.mubr.f32.gmra.mxu0 %v294
      %v469 = vpop.f32.mrf.mxu0
      %v470 = vadd.f32 %v269, %v469
      %v471 = vpop.f32.mrf.mxu0
      %472 = vmatprep.mubr.f32.mxu0 0.0
      %473 = vmatmul.mubr.f32.gmra.mxu0 %v297
      %v474 = vpop.f32.mrf.mxu0
      %v475 = vadd.f32 %v269, %v474
      %v476 = vpop.f32.mrf.mxu0
      %477 = vmatprep.mubr.f32.mxu0 0.0
      %478 = vmatmul.mubr.f32.gmra.mxu0 %v300
      %v479 = vpop.f32.mrf.mxu0
      %v480 = vadd.f32 %v269, %v479
      %v481 = vpop.f32.mrf.mxu0
      %482 = vmatprep.mubr.f32.mxu0 0.0
      %483 = vmatmul.mubr.f32.gmra.mxu0 %v303
      %v484 = vpop.f32.mrf.mxu0
      %v485 = vadd.f32 %v269, %v484
      %v486 = vpop.f32.mrf.mxu0
      %487 = vmatprep.mubr.f32.mxu0 0.0
      %488 = vmatmul.mubr.f32.gmra.mxu0 %v306
      %v489 = vpop.f32.mrf.mxu0
      %v490 = vadd.f32 %v269, %v489
      %v491 = vpop.f32.mrf.mxu0
      %492 = vmatprep.mubr.f32.mxu0 0.0
      %493 = vmatmul.mubr.f32.gmra.mxu0 %v309
      %v494 = vpop.f32.mrf.mxu0
      %v495 = vadd.f32 %v269, %v494
      %v496 = vpop.f32.mrf.mxu0
      %497 = vmatprep.mubr.f32.mxu0 0.0
      %498 = vmatmul.mubr.f32.gmra.mxu0 %v312
      %v499 = vpop.f32.mrf.mxu0
      %v500 = vadd.f32 %v269, %v499
      %v501 = vpop.f32.mrf.mxu0
      %502 = vmatprep.mubr.f32.mxu0 0.0
      %503 = vmatmul.mubr.f32.gmra.mxu0 %v315
      %v504 = vpop.f32.mrf.mxu0
      %v505 = vadd.f32 %v269, %v504
      %v506 = vpop.f32.mrf.mxu0
      %507 = vmatprep.mubr.f32.mxu0 0.0
      %508 = vmatmul.mubr.f32.gmra.mxu0 %v318
      %v509 = vpop.f32.mrf.mxu0
      %v510 = vadd.f32 %v269, %v509
      %v511 = vpop.f32.mrf.mxu0
      %512 = vmatprep.mubr.f32.mxu0 0.0
      %513 = vmatmul.mubr.f32.gmra.mxu0 %v321
      %v514 = vpop.f32.mrf.mxu0
      %v515 = vadd.f32 %v269, %v514
      %v516 = vpop.f32.mrf.mxu0
      %517 = vmatprep.mubr.f32.mxu0 0.0
      %518 = vmatmul.mubr.f32.gmra.mxu0 %v324
      %v519 = vpop.f32.mrf.mxu0
      %v520 = vadd.f32 %v269, %v519
      %v521 = vpop.f32.mrf.mxu0
      %522 = vmatprep.mubr.f32.mxu0 0.0
      %523 = vmatmul.mubr.f32.gmra.mxu0 %v327
      %v524 = vpop.f32.mrf.mxu0
      %v525 = vadd.f32 %v269, %v524
      %v526 = vpop.f32.mrf.mxu0
      %527 = vmatprep.mubr.f32.mxu0 0.0
      %528 = vmatmul.mubr.f32.gmra.mxu0 %v330
      %v529 = vpop.f32.mrf.mxu0
      %v530 = vadd.f32 %v269, %v529
      %v531 = vpop.f32.mrf.mxu0
      %532 = vmatprep.mubr.f32.mxu0 0.0
      %533 = vmatmul.mubr.f32.gmra.mxu0 %v333
      %v534 = vpop.f32.mrf.mxu0
      %v535 = vadd.f32 %v269, %v534
      %v536 = vpop.f32.mrf.mxu0
      %537 = vmatprep.mubr.f32.mxu0 0.0
      %538 = vmatmul.mubr.f32.gmra.mxu0 %v336
      %v539 = vpop.f32.mrf.mxu0
      %v540 = vadd.f32 %v269, %v539
      %v541 = vpop.f32.mrf.mxu0
      %542 = vmatprep.mubr.f32.mxu0 0.0
      %543 = vmatmul.mubr.f32.gmra.mxu0 %v339
      %v544 = vpop.f32.mrf.mxu0
      %v545 = vadd.f32 %v269, %v544
      %v546 = vpop.f32.mrf.mxu0
      %547 = vmatprep.mubr.f32.mxu0 0.0
      %548 = vmatmul.mubr.f32.gmra.mxu0 %v342
      %v549 = vpop.f32.mrf.mxu0
      %v550 = vadd.f32 %v269, %v549
      %v551 = vpop.f32.mrf.mxu0
      %552 = vmatprep.mubr.f32.mxu0 0.0
      %553 = vmatmul.mubr.f32.gmra.mxu0 %v345
      %v554 = vpop.f32.mrf.mxu0
      %v555 = vadd.f32 %v269, %v554
      %v556 = vpop.f32.mrf.mxu0
      %557 = vmatprep.mubr.f32.mxu0 0.0
      %558 = vmatmul.mubr.f32.gmra.mxu0 %v348
      %v559 = vpop.f32.mrf.mxu0
      %v560 = vadd.f32 %v269, %v559
      %v561 = vpop.f32.mrf.mxu0
      %562 = vmatprep.mubr.f32.mxu0 0.0
      %563 = vmatmul.mubr.f32.gmra.mxu0 %v351
      %v564 = vpop.f32.mrf.mxu0
      %v565 = vadd.f32 %v269, %v564
      %v566 = vpop.f32.mrf.mxu0
      %567 = vmatprep.mubr.f32.mxu0 0.0
      %568 = vmatmul.mubr.f32.gmra.mxu0 %v354
      %v569 = vpop.f32.mrf.mxu0
      %v570 = vadd.f32 %v269, %v569
      %v571 = vpop.f32.mrf.mxu0
      %572 = vmatprep.mubr.f32.mxu0 0.0
      %573 = vmatmul.mubr.f32.gmra.mxu0 %v357
      %v574 = vpop.f32.mrf.mxu0
      %v575 = vadd.f32 %v269, %v574
      %v576 = vpop.f32.mrf.mxu0
      %577 = vmatprep.mubr.f32.mxu0 0.0
      %578 = vmatmul.mubr.f32.gmra.mxu0 %v360
      %v579 = vpop.f32.mrf.mxu0
      %v580 = vadd.f32 %v269, %v579
      %v581 = vpop.f32.mrf.mxu0
      %582 = vmatprep.mubr.f32.mxu0 0.0
      %583 = vmatmul.mubr.f32.gmra.mxu0 %v363
      %v584 = vpop.f32.mrf.mxu0
      %v585 = vadd.f32 %v269, %v584
      %v586 = vpop.f32.mrf.mxu0
      %587 = vmatprep.mubr.f32.mxu0 0.0
      %588 = vmatmul.mubr.f32.gmra.mxu0 %v366
      %v589 = vpop.f32.mrf.mxu0
      %v590 = vadd.f32 %v269, %v589
      %v591 = vpop.f32.mrf.mxu0
      %592 = vdwg.mxu0
      %v593 = vtanh.pop %v435
      %v594 = vtanh.pop %v440
      %v595 = vtanh.pop %v445
      %v596 = vtanh.pop %v450
      %v597 = vtanh.pop %v455
      %v598 = vtanh.pop %v460
      %v599 = vtanh.pop %v465
      %v600 = vtanh.pop %v470
      %v601 = vtanh.pop %v475
      %v602 = vtanh.pop %v480
      %v603 = vtanh.pop %v485
      %v604 = vtanh.pop %v490
      %v605 = vtanh.pop %v495
      %v606 = vtanh.pop %v500
      %v607 = vtanh.pop %v505
      %v608 = vtanh.pop %v510
      %v609 = vtanh.pop %v515
      %v610 = vtanh.pop %v520
      %v611 = vtanh.pop %v525
      %v612 = vtanh.pop %v530
      %v613 = vtanh.pop %v535
      %v614 = vtanh.pop %v540
      %v615 = vtanh.pop %v545
      %v616 = vtanh.pop %v550
      %v617 = vtanh.pop %v555
      %v618 = vtanh.pop %v560
      %v619 = vtanh.pop %v565
      %v620 = vtanh.pop %v570
      %v621 = vtanh.pop %v575
      %v622 = vtanh.pop %v580
      %v623 = vtanh.pop %v585
      %v624 = vtanh.pop %v590
      %v625 = vld [vmem:[%s3] sm:$0xff]
      %v626 = vld [vmem:[%s3 + $0x8] sm:$0xff]
      %v627 = vld [vmem:[%s3 + $0x10] sm:$0xff]
      %v628 = vld [vmem:[%s3 + $0x18] sm:$0xff]
      %v629 = vld [vmem:[%s3 + $0x20] sm:$0xff]
      %v630 = vld [vmem:[%s3 + $0x28] sm:$0xff]
      %v631 = vld [vmem:[%s3 + $0x30] sm:$0xff]
      %v632 = vld [vmem:[%s3 + $0x38] sm:$0xff]
      %v633 = vld [vmem:[%s3 + $0x40] sm:$0xff]
      %v634 = vld [vmem:[%s3 + $0x48] sm:$0xff]
      %v635 = vld [vmem:[%s3 + $0x50] sm:$0xff]
      %v636 = vld [vmem:[%s3 + $0x58] sm:$0xff]
      %v637 = vld [vmem:[%s3 + $0x60] sm:$0xff]
      %v638 = vld [vmem:[%s3 + $0x68] sm:$0xff]
      %v639 = vld [vmem:[%s3 + $0x70] sm:$0xff]
      %v640 = vld [vmem:[%s3 + $0x78] sm:$0xff]
      %v641 = vld [vmem:[%s4] sm:$0x1]
      %v643 = vlaneseq
      %v644 = vshrl.u32 %v643, 7
      %v645 = vsub.s32 0, %v644
      %v646 = vrot.slane %v641, %v645
      %648 = vmatprep.subr.mxu0 0.0
      %649 = vmatpush1.msra.mxu0 %v640
      %650 = vmatprep.subr.mxu0 0.0
      %651 = vmatpush1.msra.mxu0 %v639
      %652 = vmatprep.subr.mxu0 0.0
      %653 = vmatpush1.msra.mxu0 %v638
      %654 = vmatprep.subr.mxu0 0.0
      %655 = vmatpush1.msra.mxu0 %v637
      %656 = vmatprep.subr.mxu0 0.0
      %657 = vmatpush1.msra.mxu0 %v636
      %658 = vmatprep.subr.mxu0 0.0
      %659 = vmatpush1.msra.mxu0 %v635
      %660 = vmatprep.subr.mxu0 0.0
      %661 = vmatpush1.msra.mxu0 %v634
      %662 = vmatprep.subr.mxu0 0.0
      %663 = vmatpush1.msra.mxu0 %v633
      %664 = vmatprep.subr.mxu0 0.0
      %665 = vmatpush1.msra.mxu0 %v632
      %666 = vmatprep.subr.mxu0 0.0
      %667 = vmatpush1.msra.mxu0 %v631
      %668 = vmatprep.subr.mxu0 0.0
      %669 = vmatpush1.msra.mxu0 %v630
      %670 = vmatprep.subr.mxu0 0.0
      %671 = vmatpush1.msra.mxu0 %v629
      %672 = vmatprep.subr.mxu0 0.0
      %673 = vmatpush1.msra.mxu0 %v628
      %674 = vmatprep.subr.mxu0 0.0
      %675 = vmatpush1.msra.mxu0 %v627
      %676 = vmatprep.subr.mxu0 0.0
      %677 = vmatpush1.msra.mxu0 %v626
      %678 = vmatprep.subr.mxu0 0.0
      %679 = vmatpush1.msra.mxu0 %v625
      %680 = vmatprep.subr.mxu0 0.0
      %681 = vmatpush2.msra.mxu0 0.0
      %682 = vmatprep.subr.mxu0 0.0
      %683 = vmatpush2.msra.mxu0 0.0
      %684 = vmatprep.subr.mxu0 0.0
      %685 = vmatpush2.msra.mxu0 0.0
      %686 = vmatprep.subr.mxu0 0.0
      %687 = vmatpush2.msra.mxu0 0.0
      %688 = vmatprep.subr.mxu0 0.0
      %689 = vmatpush2.msra.mxu0 0.0
      %690 = vmatprep.subr.mxu0 0.0
      %691 = vmatpush2.msra.mxu0 0.0
      %692 = vmatprep.subr.mxu0 0.0
      %693 = vmatpush2.msra.mxu0 0.0
      %694 = vmatprep.subr.mxu0 0.0
      %695 = vmatpush2.msra.mxu0 0.0
      %696 = vmatprep.subr.mxu0 0.0
      %697 = vmatpush2.msra.mxu0 0.0
      %698 = vmatprep.subr.mxu0 0.0
      %699 = vmatpush2.msra.mxu0 0.0
      %700 = vmatprep.subr.mxu0 0.0
      %701 = vmatpush2.msra.mxu0 0.0
      %702 = vmatprep.subr.mxu0 0.0
      %703 = vmatpush2.msra.mxu0 0.0
      %704 = vmatprep.subr.mxu0 0.0
      %705 = vmatpush2.msra.mxu0 0.0
      %706 = vmatprep.subr.mxu0 0.0
      %707 = vmatpush2.msra.mxu0 0.0
      %708 = vmatprep.subr.mxu0 0.0
      %709 = vmatpush2.msra.mxu0 0.0
      %710 = vmatprep.subr.mxu0 0.0
      %711 = vmatpush2.msra.mxu0 0.0
      %712 = vmatprep.mubr.f32.mxu0 0.0
      %713 = vmatmul.mubr.f32.gmra.mxu0 %v593
      %v714 = vpop.f32.mrf.mxu0
      %v715 = vadd.f32 %v646, %v714
      %v716 = vpop.f32.mrf.mxu0
      %717 = vmatprep.mubr.f32.mxu0 0.0
      %718 = vmatmul.mubr.f32.gmra.mxu0 %v594
      %v719 = vpop.f32.mrf.mxu0
      %v720 = vadd.f32 %v646, %v719
      %v721 = vpop.f32.mrf.mxu0
      %722 = vmatprep.mubr.f32.mxu0 0.0
      %723 = vmatmul.mubr.f32.gmra.mxu0 %v595
      %v724 = vpop.f32.mrf.mxu0
      %v725 = vadd.f32 %v646, %v724
      %v726 = vpop.f32.mrf.mxu0
      %727 = vmatprep.mubr.f32.mxu0 0.0
      %728 = vmatmul.mubr.f32.gmra.mxu0 %v596
      %v729 = vpop.f32.mrf.mxu0
      %v730 = vadd.f32 %v646, %v729
      %v731 = vpop.f32.mrf.mxu0
      %732 = vmatprep.mubr.f32.mxu0 0.0
      %733 = vmatmul.mubr.f32.gmra.mxu0 %v597
      %v734 = vpop.f32.mrf.mxu0
      %v735 = vadd.f32 %v646, %v734
      %v736 = vpop.f32.mrf.mxu0
      %737 = vmatprep.mubr.f32.mxu0 0.0
      %738 = vmatmul.mubr.f32.gmra.mxu0 %v598
      %v739 = vpop.f32.mrf.mxu0
      %v740 = vadd.f32 %v646, %v739
      %v741 = vpop.f32.mrf.mxu0
      %742 = vmatprep.mubr.f32.mxu0 0.0
      %743 = vmatmul.mubr.f32.gmra.mxu0 %v599
      %v744 = vpop.f32.mrf.mxu0
      %v745 = vadd.f32 %v646, %v744
      %v746 = vpop.f32.mrf.mxu0
      %747 = vmatprep.mubr.f32.mxu0 0.0
      %748 = vmatmul.mubr.f32.gmra.mxu0 %v600
      %v749 = vpop.f32.mrf.mxu0
      %v750 = vadd.f32 %v646, %v749
      %v751 = vpop.f32.mrf.mxu0
      %752 = vmatprep.mubr.f32.mxu0 0.0
      %753 = vmatmul.mubr.f32.gmra.mxu0 %v601
      %v754 = vpop.f32.mrf.mxu0
      %v755 = vadd.f32 %v646, %v754
      %v756 = vpop.f32.mrf.mxu0
      %757 = vmatprep.mubr.f32.mxu0 0.0
      %758 = vmatmul.mubr.f32.gmra.mxu0 %v602
      %v759 = vpop.f32.mrf.mxu0
      %v760 = vadd.f32 %v646, %v759
      %v761 = vpop.f32.mrf.mxu0
      %762 = vmatprep.mubr.f32.mxu0 0.0
      %763 = vmatmul.mubr.f32.gmra.mxu0 %v603
      %v764 = vpop.f32.mrf.mxu0
      %v765 = vadd.f32 %v646, %v764
      %v766 = vpop.f32.mrf.mxu0
      %767 = vmatprep.mubr.f32.mxu0 0.0
      %768 = vmatmul.mubr.f32.gmra.mxu0 %v604
      %v769 = vpop.f32.mrf.mxu0
      %v770 = vadd.f32 %v646, %v769
      %v771 = vpop.f32.mrf.mxu0
      %772 = vmatprep.mubr.f32.mxu0 0.0
      %773 = vmatmul.mubr.f32.gmra.mxu0 %v605
      %v774 = vpop.f32.mrf.mxu0
      %v775 = vadd.f32 %v646, %v774
      %v776 = vpop.f32.mrf.mxu0
      %777 = vmatprep.mubr.f32.mxu0 0.0
      %778 = vmatmul.mubr.f32.gmra.mxu0 %v606
      %v779 = vpop.f32.mrf.mxu0
      %v780 = vadd.f32 %v646, %v779
      %v781 = vpop.f32.mrf.mxu0
      %782 = vmatprep.mubr.f32.mxu0 0.0
      %783 = vmatmul.mubr.f32.gmra.mxu0 %v607
      %v784 = vpop.f32.mrf.mxu0
      %v785 = vadd.f32 %v646, %v784
      %v786 = vpop.f32.mrf.mxu0
      %787 = vmatprep.mubr.f32.mxu0 0.0
      %788 = vmatmul.mubr.f32.gmra.mxu0 %v608
      %v789 = vpop.f32.mrf.mxu0
      %v790 = vadd.f32 %v646, %v789
      %v791 = vpop.f32.mrf.mxu0
      %792 = vmatprep.mubr.f32.mxu0 0.0
      %793 = vmatmul.mubr.f32.gmra.mxu0 %v609
      %v794 = vpop.f32.mrf.mxu0
      %v795 = vadd.f32 %v646, %v794
      %v796 = vpop.f32.mrf.mxu0
      %797 = vmatprep.mubr.f32.mxu0 0.0
      %798 = vmatmul.mubr.f32.gmra.mxu0 %v610
      %v799 = vpop.f32.mrf.mxu0
      %v800 = vadd.f32 %v646, %v799
      %v801 = vpop.f32.mrf.mxu0
      %802 = vmatprep.mubr.f32.mxu0 0.0
      %803 = vmatmul.mubr.f32.gmra.mxu0 %v611
      %v804 = vpop.f32.mrf.mxu0
      %v805 = vadd.f32 %v646, %v804
      %v806 = vpop.f32.mrf.mxu0
      %807 = vmatprep.mubr.f32.mxu0 0.0
      %808 = vmatmul.mubr.f32.gmra.mxu0 %v612
      %v809 = vpop.f32.mrf.mxu0
      %v810 = vadd.f32 %v646, %v809
      %v811 = vpop.f32.mrf.mxu0
      %812 = vmatprep.mubr.f32.mxu0 0.0
      %813 = vmatmul.mubr.f32.gmra.mxu0 %v613
      %v814 = vpop.f32.mrf.mxu0
      %v815 = vadd.f32 %v646, %v814
      %v816 = vpop.f32.mrf.mxu0
      %817 = vmatprep.mubr.f32.mxu0 0.0
      %818 = vmatmul.mubr.f32.gmra.mxu0 %v614
      %v819 = vpop.f32.mrf.mxu0
      %v820 = vadd.f32 %v646, %v819
      %v821 = vpop.f32.mrf.mxu0
      %822 = vmatprep.mubr.f32.mxu0 0.0
      %823 = vmatmul.mubr.f32.gmra.mxu0 %v615
      %v824 = vpop.f32.mrf.mxu0
      %v825 = vadd.f32 %v646, %v824
      %v826 = vpop.f32.mrf.mxu0
      %827 = vmatprep.mubr.f32.mxu0 0.0
      %828 = vmatmul.mubr.f32.gmra.mxu0 %v616
      %v829 = vpop.f32.mrf.mxu0
      %v830 = vadd.f32 %v646, %v829
      %v831 = vpop.f32.mrf.mxu0
      %832 = vmatprep.mubr.f32.mxu0 0.0
      %833 = vmatmul.mubr.f32.gmra.mxu0 %v617
      %v834 = vpop.f32.mrf.mxu0
      %v835 = vadd.f32 %v646, %v834
      %v836 = vpop.f32.mrf.mxu0
      %837 = vmatprep.mubr.f32.mxu0 0.0
      %838 = vmatmul.mubr.f32.gmra.mxu0 %v618
      %v839 = vpop.f32.mrf.mxu0
      %v840 = vadd.f32 %v646, %v839
      %v841 = vpop.f32.mrf.mxu0
      %842 = vmatprep.mubr.f32.mxu0 0.0
      %843 = vmatmul.mubr.f32.gmra.mxu0 %v619
      %v844 = vpop.f32.mrf.mxu0
      %v845 = vadd.f32 %v646, %v844
      %v846 = vpop.f32.mrf.mxu0
      %847 = vmatprep.mubr.f32.mxu0 0.0
      %848 = vmatmul.mubr.f32.gmra.mxu0 %v620
      %v849 = vpop.f32.mrf.mxu0
      %v850 = vadd.f32 %v646, %v849
      %v851 = vpop.f32.mrf.mxu0
      %852 = vmatprep.mubr.f32.mxu0 0.0
      %853 = vmatmul.mubr.f32.gmra.mxu0 %v621
      %v854 = vpop.f32.mrf.mxu0
      %v855 = vadd.f32 %v646, %v854
      %v856 = vpop.f32.mrf.mxu0
      %857 = vmatprep.mubr.f32.mxu0 0.0
      %858 = vmatmul.mubr.f32.gmra.mxu0 %v622
      %v859 = vpop.f32.mrf.mxu0
      %v860 = vadd.f32 %v646, %v859
      %v861 = vpop.f32.mrf.mxu0
      %862 = vmatprep.mubr.f32.mxu0 0.0
      %863 = vmatmul.mubr.f32.gmra.mxu0 %v623
      %v864 = vpop.f32.mrf.mxu0
      %v865 = vadd.f32 %v646, %v864
      %v866 = vpop.f32.mrf.mxu0
      %867 = vmatprep.mubr.f32.mxu0 0.0
      %868 = vmatmul.mubr.f32.gmra.mxu0 %v624
      %v869 = vpop.f32.mrf.mxu0
      %v870 = vadd.f32 %v646, %v869
      %v871 = vpop.f32.mrf.mxu0
      %872 = vdwg.mxu0
      %v873 = vtanh.pop %v715
      %v874 = vtanh.pop %v720
      %v875 = vtanh.pop %v725
      %v876 = vtanh.pop %v730
      %v877 = vtanh.pop %v735
      %v878 = vtanh.pop %v740
      %v879 = vtanh.pop %v745
      %v880 = vtanh.pop %v750
      %v881 = vtanh.pop %v755
      %v882 = vtanh.pop %v760
      %v883 = vtanh.pop %v765
      %v884 = vtanh.pop %v770
      %v885 = vtanh.pop %v775
      %v886 = vtanh.pop %v780
      %v887 = vtanh.pop %v785
      %v888 = vtanh.pop %v790
      %v889 = vtanh.pop %v795
      %v890 = vtanh.pop %v800
      %v891 = vtanh.pop %v805
      %v892 = vtanh.pop %v810
      %v893 = vtanh.pop %v815
      %v894 = vtanh.pop %v820
      %v895 = vtanh.pop %v825
      %v896 = vtanh.pop %v830
      %v897 = vtanh.pop %v835
      %v898 = vtanh.pop %v840
      %v899 = vtanh.pop %v845
      %v900 = vtanh.pop %v850
      %v901 = vtanh.pop %v855
      %v902 = vtanh.pop %v860
      %v903 = vtanh.pop %v865
      %v904 = vtanh.pop %v870
      %905 = vst [vmem:[%s226] sm:$0xff] %v873
      %906 = vst [vmem:[%s226 + $0x8] sm:$0xff] %v874
      %907 = vst [vmem:[%s226 + $0x10] sm:$0xff] %v875
      %908 = vst [vmem:[%s226 + $0x18] sm:$0xff] %v876
      %909 = vst [vmem:[%s226 + $0x20] sm:$0xff] %v877
      %910 = vst [vmem:[%s226 + $0x28] sm:$0xff] %v878
      %911 = vst [vmem:[%s226 + $0x30] sm:$0xff] %v879
      %912 = vst [vmem:[%s226 + $0x38] sm:$0xff] %v880
      %913 = vst [vmem:[%s226 + $0x40] sm:$0xff] %v881
      %914 = vst [vmem:[%s226 + $0x48] sm:$0xff] %v882
      %915 = vst [vmem:[%s226 + $0x50] sm:$0xff] %v883
      %916 = vst [vmem:[%s226 + $0x58] sm:$0xff] %v884
      %917 = vst [vmem:[%s226 + $0x60] sm:$0xff] %v885
      %918 = vst [vmem:[%s226 + $0x68] sm:$0xff] %v886
      %919 = vst [vmem:[%s226 + $0x70] sm:$0xff] %v887
      %920 = vst [vmem:[%s226 + $0x78] sm:$0xff] %v888
      %921 = vst [vmem:[%s226 + $0x80] sm:$0xff] %v889
      %922 = vst [vmem:[%s226 + $0x88] sm:$0xff] %v890
      %923 = vst [vmem:[%s226 + $0x90] sm:$0xff] %v891
      %924 = vst [vmem:[%s226 + $0x98] sm:$0xff] %v892
      %925 = vst [vmem:[%s226 + $0xa0] sm:$0xff] %v893
      %926 = vst [vmem:[%s226 + $0xa8] sm:$0xff] %v894
      %927 = vst [vmem:[%s226 + $0xb0] sm:$0xff] %v895
      %928 = vst [vmem:[%s226 + $0xb8] sm:$0xff] %v896
      %929 = vst [vmem:[%s226 + $0xc0] sm:$0xff] %v897
      %930 = vst [vmem:[%s226 + $0xc8] sm:$0xff] %v898
      %931 = vst [vmem:[%s226 + $0xd0] sm:$0xff] %v899
      %932 = vst [vmem:[%s226 + $0xd8] sm:$0xff] %v900
      %933 = vst [vmem:[%s226 + $0xe0] sm:$0xff] %v901
      %934 = vst [vmem:[%s226 + $0xe8] sm:$0xff] %v902
      %935 = vst [vmem:[%s226 + $0xf0] sm:$0xff] %v903
      %936 = vst [vmem:[%s226 + $0xf8] sm:$0xff] %v904
      %s937 = smul.u32 32, %s16
      %p938 = scmp.lt.s32.totalorder %s937, 63
      %s939 = scalar_select %p938, %s937, 63
      %s940 = smul.addr %s939, 8
      %s941 = scalar_lea.vmem %s5, %s940
      // Predicated region
      $region41: #{_ff1_forward_impl.1} parent=39 // pred_check
        %p942 = pneg %p144
      $region42: #{_ff1_forward_impl.1} parent=39 // pred_check_branch
        %944 = sbr.rel (%p942) target = $region44
      $region43: #{_ff1_forward_impl.1} parent=39 // pred_region
        %s945 = smul.u32 32, %s16
      $region44: #{_ff1_forward_impl.1} parent=39 // pred_fallthru
        _
    $region40: #{_ff1_forward_impl.1} parent=5 // pred_fallthru
      _
    %p946 = scmp.le.s32.totalorder 2, %s11
    // Predicated region
    $region45: #{_ff1_forward_impl.1} parent=5 // pred_check
      %p947 = pneg %p946
    $region46: #{_ff1_forward_impl.1} parent=5 // pred_check_branch
      %949 = sbr.rel (%p947) target = $region48
    $region47: #{_ff1_forward_impl.1} parent=5 // pred_region
      %s950 = ssub.s32 %s11, 2
      // Predicated region
      $region49: #{_ff1_forward_impl.1} parent=47 // pred_check
        %p951 = pneg %p150
      $region50: #{_ff1_forward_impl.1} parent=47 // pred_check_branch
        %953 = sbr.rel (%p951) target = $region52
      $region51: #{_ff1_forward_impl.1} parent=47 // pred_region
        %s954 = smul.u32 32, %s17
        %p955 = scmp.lt.s32.totalorder %s954, 63
        %s956 = scalar_select %p955, %s954, 63
        %s957 = smul.addr %s956, 8
        %s958 = scalar_lea.vmem %s5, %s957
      $region52: #{_ff1_forward_impl.1} parent=47 // pred_fallthru
        _
    $region48: #{_ff1_forward_impl.1} parent=5 // pred_fallthru
      _
  $region6: #{_ff1_forward_impl.1} parent=0 // loop_footer
    %s15 = sadd.s32 1, %s11
  $region7: #{_ff1_forward_impl.1} parent=0 // loop_footer_branch
    %10 = sbr.rel target = $region3
  $region8: #{_ff1_forward_impl.1} parent=0 // loop_exit
    _

// kernel: _ff1_forward_impl.1
$region0: #{_ff1_forward_impl.1}
  #allocation0 [shape = 'u32[]', space=smem, size = 0x4, offset = 0x4, fixed_abs, tag = 'smem constant byte address 0x4 - core index']
  #allocation1 [shape = 'u32[144,128]{1,0:T(1,128)}', space=vmem, size = 0x12000, scoped, tag = 'internal scratch']
  %s0 = inlined_call_operand.vmem [shape: f32[512,32], index: 0, kind: input, shape index: {}]
  %s1 = inlined_call_operand.vmem [shape: f32[32,128], index: 1, kind: input, shape index: {}]
  %s2 = inlined_call_operand.vmem [shape: f32[1,128], index: 2, kind: input, shape index: {}]
  %s3 = inlined_call_operand.vmem [shape: f32[128,128], index: 3, kind: input, shape index: {}]
  %s4 = inlined_call_operand.vmem [shape: f32[1,128], index: 4, kind: input, shape index: {}]
  %s5 = inlined_call_operand.vmem [shape: f32[512,128], index: 5, kind: output, shape index: {}]
  %s6 = sld [smem:[#allocation0]]
  $region53: #{_ff1_forward_impl.1} parent=0
    _
  %s8 = ssub.s32 1, %s6
  %s9 = scalar_select 0, %s8, %s6
  loop: start=0, step=1, limit=4
  $region2: #{_ff1_forward_impl.1} parent=0 // loop_pre_header
    _
  $region3: #{_ff1_forward_impl.1} parent=0 // loop_header
    %s11 = sphi 0, %s15
    %p12 = scmp.ge.s32.totalorder %s11, 4
    %s21 = sphi 0, %s23
    %s24 = sphi 0, %s21
    %s25 = sphi 0, %s24
    %s41 = sphi 0, %s25
    %s45 = sphi 0, %s45
    %s47 = sphi 0, %s45
    %s48 = sphi 0, %s47
    %s62 = sphi 0, %s48
    %s66 = sphi 0, %s66
    %s68 = sphi 0, %s66
    %s69 = sphi 0, %s68
    %s83 = sphi 0, %s69
    %s87 = sphi 0, %s87
    %s89 = sphi 0, %s87
    %s90 = sphi 0, %s89
    %s104 = sphi 0, %s90
    %s108 = sphi 0, %s108
    %s110 = sphi 0, %s108
    %s111 = sphi 0, %s110
    %s125 = sphi 0, %s111
    %s131 = sphi 0, %s133
    %s134 = sphi 0, %s131
    %s135 = sphi 0, %s134
    %s151 = sphi 0, %s135
  $region4: #{_ff1_forward_impl.1} parent=0 // loop_header_branch
    %14 = sbr.rel (%p12) target = $region8
  $region5: #{_ff1_forward_impl.1} parent=0 // loop_body
    %s16 = ssub.s32 %s11, 1
    %s17 = ssub.s32 %s11, 2
    %s18 = sadd.s32 %s11, 1
    %s19 = ssub.s32 %s11, %s18
    %p20 = scmp.eq.s32.totalorder %s19, 0
    %s22 = sadd.s32 %s21, 1
    %s23 = scalar_select %p20, %s21, %s22
    %p26 = pneg %p20
    %p27 = scmp.eq.s32.totalorder %s11, 1
    %p28 = por %p26, %p27
    %p29 = scmp.ne.s32.totalorder %s21, %s24
    %p30 = scmp.eq.s32.totalorder %s11, 0
    %p31 = por %p29, %p30
    %p32 = scmp.ne.s32.totalorder %s21, %s24
    %p33 = scmp.eq.s32.totalorder %s16, 1
    %p34 = por %p32, %p33
    %p35 = scmp.ne.s32.totalorder %s24, %s25
    %p36 = scmp.eq.s32.totalorder %s16, 0
    %p37 = por %p35, %p36
    %p38 = scmp.ne.s32.totalorder %s24, %s25
    %p39 = scmp.eq.s32.totalorder %s17, 1
    %p40 = por %p38, %p39
    %p42 = scmp.ne.s32.totalorder %s25, %s41
    %p43 = scmp.eq.s32.totalorder %s17, 0
    %p44 = por %p42, %p43
    %s46 = sadd.s32 %s45, 1
    %p49 = scmp.eq.s32.totalorder %s11, 1
    %p50 = scmp.ne.s32.totalorder %s45, %s47
    %p51 = scmp.eq.s32.totalorder %s11, 0
    %p52 = por %p50, %p51
    %p53 = scmp.ne.s32.totalorder %s45, %s47
    %p54 = scmp.eq.s32.totalorder %s16, 1
    %p55 = por %p53, %p54
    %p56 = scmp.ne.s32.totalorder %s47, %s48
    %p57 = scmp.eq.s32.totalorder %s16, 0
    %p58 = por %p56, %p57
    %p59 = scmp.ne.s32.totalorder %s47, %s48
    %p60 = scmp.eq.s32.totalorder %s17, 1
    %p61 = por %p59, %p60
    %p63 = scmp.ne.s32.totalorder %s48, %s62
    %p64 = scmp.eq.s32.totalorder %s17, 0
    %p65 = por %p63, %p64
    %s67 = sadd.s32 %s66, 1
    %p70 = scmp.eq.s32.totalorder %s11, 1
    %p71 = scmp.ne.s32.totalorder %s66, %s68
    %p72 = scmp.eq.s32.totalorder %s11, 0
    %p73 = por %p71, %p72
    %p74 = scmp.ne.s32.totalorder %s66, %s68
    %p75 = scmp.eq.s32.totalorder %s16, 1
    %p76 = por %p74, %p75
    %p77 = scmp.ne.s32.totalorder %s68, %s69
    %p78 = scmp.eq.s32.totalorder %s16, 0
    %p79 = por %p77, %p78
    %p80 = scmp.ne.s32.totalorder %s68, %s69
    %p81 = scmp.eq.s32.totalorder %s17, 1
    %p82 = por %p80, %p81
    %p84 = scmp.ne.s32.totalorder %s69, %s83
    %p85 = scmp.eq.s32.totalorder %s17, 0
    %p86 = por %p84, %p85
    %s88 = sadd.s32 %s87, 1
    %p91 = scmp.eq.s32.totalorder %s11, 1
    %p92 = scmp.ne.s32.totalorder %s87, %s89
    %p93 = scmp.eq.s32.totalorder %s11, 0
    %p94 = por %p92, %p93
    %p95 = scmp.ne.s32.totalorder %s87, %s89
    %p96 = scmp.eq.s32.totalorder %s16, 1
    %p97 = por %p95, %p96
    %p98 = scmp.ne.s32.totalorder %s89, %s90
    %p99 = scmp.eq.s32.totalorder %s16, 0
    %p100 = por %p98, %p99
    %p101 = scmp.ne.s32.totalorder %s89, %s90
    %p102 = scmp.eq.s32.totalorder %s17, 1
    %p103 = por %p101, %p102
    %p105 = scmp.ne.s32.totalorder %s90, %s104
    %p106 = scmp.eq.s32.totalorder %s17, 0
    %p107 = por %p105, %p106
    %s109 = sadd.s32 %s108, 1
    %p112 = scmp.eq.s32.totalorder %s11, 1
    %p113 = scmp.ne.s32.totalorder %s108, %s110
    %p114 = scmp.eq.s32.totalorder %s11, 0
    %p115 = por %p113, %p114
    %p116 = scmp.ne.s32.totalorder %s108, %s110
    %p117 = scmp.eq.s32.totalorder %s16, 1
    %p118 = por %p116, %p117
    %p119 = scmp.ne.s32.totalorder %s110, %s111
    %p120 = scmp.eq.s32.totalorder %s16, 0
    %p121 = por %p119, %p120
    %p122 = scmp.ne.s32.totalorder %s110, %s111
    %p123 = scmp.eq.s32.totalorder %s17, 1
    %p124 = por %p122, %p123
    %p126 = scmp.ne.s32.totalorder %s111, %s125
    %p127 = scmp.eq.s32.totalorder %s17, 0
    %p128 = por %p126, %p127
    %s129 = ssub.s32 %s11, %s18
    %p130 = scmp.eq.s32.totalorder %s129, 0
    %s132 = sadd.s32 %s131, 1
    %s133 = scalar_select %p130, %s131, %s132
    %p136 = pneg %p130
    %p137 = scmp.eq.s32.totalorder %s11, 1
    %p138 = por %p136, %p137
    %p139 = scmp.ne.s32.totalorder %s131, %s134
    %p140 = scmp.eq.s32.totalorder %s11, 0
    %p141 = por %p139, %p140
    %p142 = scmp.ne.s32.totalorder %s131, %s134
    %p143 = scmp.eq.s32.totalorder %s16, 1
    %p144 = por %p142, %p143
    %p145 = scmp.ne.s32.totalorder %s134, %s135
    %p146 = scmp.eq.s32.totalorder %s16, 0
    %p147 = por %p145, %p146
    %p148 = scmp.ne.s32.totalorder %s134, %s135
    %p149 = scmp.eq.s32.totalorder %s17, 1
    %p150 = por %p148, %p149
    %p152 = scmp.ne.s32.totalorder %s135, %s151
    %p153 = scmp.eq.s32.totalorder %s17, 0
    %p154 = por %p152, %p153
    %p155 = scmp.le.s32.totalorder 1, %s11
    %p156 = scmp.lt.s32.totalorder %s11, 3
    %p157 = pnand %p155, %p156
    %p158 = pneg %p157
    // Predicated region
    $region9: #{_ff1_forward_impl.1} parent=5 // pred_check
      _
    $region10: #{_ff1_forward_impl.1} parent=5 // pred_check_branch
      %160 = sbr.rel (%p157) target = $region12
    $region11: #{_ff1_forward_impl.1} parent=5 // pred_region
      %s161 = ssub.s32 %s11, 1
      // Predicated region
      $region13: #{_ff1_forward_impl.1} parent=11 // pred_check
        %p162 = pneg %p58
      $region14: #{_ff1_forward_impl.1} parent=11 // pred_check_branch
        %164 = sbr.rel (%p162) target = $region16
      $region15: #{_ff1_forward_impl.1} parent=11 // pred_region
        _
      $region16: #{_ff1_forward_impl.1} parent=11 // pred_fallthru
        _
      // Predicated region
      $region17: #{_ff1_forward_impl.1} parent=11 // pred_check
        %p165 = pneg %p79
      $region18: #{_ff1_forward_impl.1} parent=11 // pred_check_branch
        %167 = sbr.rel (%p165) target = $region20
      $region19: #{_ff1_forward_impl.1} parent=11 // pred_region
        _
      $region20: #{_ff1_forward_impl.1} parent=11 // pred_fallthru
        _
      // Predicated region
      $region21: #{_ff1_forward_impl.1} parent=11 // pred_check
        %p168 = pneg %p100
      $region22: #{_ff1_forward_impl.1} parent=11 // pred_check_branch
        %170 = sbr.rel (%p168) target = $region24
      $region23: #{_ff1_forward_impl.1} parent=11 // pred_region
        _
      $region24: #{_ff1_forward_impl.1} parent=11 // pred_fallthru
        _
      // Predicated region
      $region25: #{_ff1_forward_impl.1} parent=11 // pred_check
        %p171 = pneg %p121
      $region26: #{_ff1_forward_impl.1} parent=11 // pred_check_branch
        %173 = sbr.rel (%p171) target = $region28
      $region27: #{_ff1_forward_impl.1} parent=11 // pred_region
        _
      $region28: #{_ff1_forward_impl.1} parent=11 // pred_fallthru
        _
    $region12: #{_ff1_forward_impl.1} parent=5 // pred_fallthru
      _
    %p174 = scmp.lt.s32.totalorder %s11, 2
    // Predicated region
    $region29: #{_ff1_forward_impl.1} parent=5 // pred_check
      %p175 = pneg %p174
    $region30: #{_ff1_forward_impl.1} parent=5 // pred_check_branch
      %177 = sbr.rel (%p175) target = $region32
    $region31: #{_ff1_forward_impl.1} parent=5 // pred_region
      // Predicated region
      $region33: #{_ff1_forward_impl.1} parent=31 // pred_check
        %p178 = pneg %p31
      $region34: #{_ff1_forward_impl.1} parent=31 // pred_check_branch
        %180 = sbr.rel (%p178) target = $region36
      $region35: #{_ff1_forward_impl.1} parent=31 // pred_region
        %s181 = smul.u32 32, %s11
        %p182 = scmp.lt.s32.totalorder %s181, 63
        %s183 = scalar_select %p182, %s181, 63
        %s184 = smul.addr %s183, 8
        %s185 = scalar_lea.vmem %s0, %s184
        %s186 = smul.u32 32, %s11
      $region36: #{_ff1_forward_impl.1} parent=31 // pred_fallthru
        _
    $region32: #{_ff1_forward_impl.1} parent=5 // pred_fallthru
      _
    %p187 = scmp.le.s32.totalorder 1, %s11
    %p188 = scmp.lt.s32.totalorder %s11, 3
    %p189 = pnand %p187, %p188
    %p190 = pneg %p189
    // Predicated region
    $region37: #{_ff1_forward_impl.1} parent=5 // pred_check
      _
    $region38: #{_ff1_forward_impl.1} parent=5 // pred_check_branch
      %192 = sbr.rel (%p189) target = $region40
    $region39: #{_ff1_forward_impl.1} parent=5 // pred_region
      %s193 = ssub.s32 %s11, 1
      %s194 = smul.u32 32, %s16
      %p195 = scmp.lt.s32.totalorder %s194, 63
      %s196 = scalar_select %p195, %s194, 63
      %s197 = smul.addr %s196, 8
      %s198 = scalar_lea.vmem %s0, %s197
      %p199 = pneg %p37
      %p200 = pneg %p34
      %p201 = pneg %p58
      %p202 = pneg %p55
      %p203 = pneg %p79
      %p204 = pneg %p76
      %p205 = pneg %p100
      %p206 = pneg %p97
      %p207 = pneg %p121
      %p208 = pneg %p118
      %p209 = pneg %p147
      %p210 = pneg %p144
      %s211 = smul.u32 32, %s16
      %p212 = scmp.lt.s32.totalorder %s211, 63
      %s213 = scalar_select %p212, %s211, 63
      %s214 = smul.addr %s213, 8
      %s215 = scalar_lea.vmem %s5, %s214
      %s216 = smul.u32 32, %s16
      %p217 = scmp.lt.s32.totalorder %s216, 63
      %s218 = scalar_select %p217, %s216, 63
      %s219 = smul.addr %s218, 8
      %s220 = scalar_lea.vmem %s0, %s219
      %s221 = smul.u32 32, %s16
      %s222 = smul.u32 32, %s16
      %p223 = scmp.lt.s32.totalorder %s222, 63
      %s224 = scalar_select %p223, %s222, 63
      %s225 = smul.addr %s224, 8
      %s226 = scalar_lea.vmem %s5, %s225
      %s227 = smul.u32 32, %s16
      %v228 = vld [vmem:[%s220] sm:$0xff]
      %v229 = vld [vmem:[%s220 + $0x8] sm:$0xff]
      %v230 = vld [vmem:[%s220 + $0x10] sm:$0xff]
      %v231 = vld [vmem:[%s220 + $0x18] sm:$0xff]
      %v232 = vld [vmem:[%s220 + $0x20] sm:$0xff]
      %v233 = vld [vmem:[%s220 + $0x28] sm:$0xff]
      %v234 = vld [vmem:[%s220 + $0x30] sm:$0xff]
      %v235 = vld [vmem:[%s220 + $0x38] sm:$0xff]
      %v236 = vld [vmem:[%s220 + $0x40] sm:$0xff]
      %v237 = vld [vmem:[%s220 + $0x48] sm:$0xff]
      %v238 = vld [vmem:[%s220 + $0x50] sm:$0xff]
      %v239 = vld [vmem:[%s220 + $0x58] sm:$0xff]
      %v240 = vld [vmem:[%s220 + $0x60] sm:$0xff]
      %v241 = vld [vmem:[%s220 + $0x68] sm:$0xff]
      %v242 = vld [vmem:[%s220 + $0x70] sm:$0xff]
      %v243 = vld [vmem:[%s220 + $0x78] sm:$0xff]
      %v244 = vld [vmem:[%s220 + $0x80] sm:$0xff]
      %v245 = vld [vmem:[%s220 + $0x88] sm:$0xff]
      %v246 = vld [vmem:[%s220 + $0x90] sm:$0xff]
      %v247 = vld [vmem:[%s220 + $0x98] sm:$0xff]
      %v248 = vld [vmem:[%s220 + $0xa0] sm:$0xff]
      %v249 = vld [vmem:[%s220 + $0xa8] sm:$0xff]
      %v250 = vld [vmem:[%s220 + $0xb0] sm:$0xff]
      %v251 = vld [vmem:[%s220 + $0xb8] sm:$0xff]
      %v252 = vld [vmem:[%s220 + $0xc0] sm:$0xff]
      %v253 = vld [vmem:[%s220 + $0xc8] sm:$0xff]
      %v254 = vld [vmem:[%s220 + $0xd0] sm:$0xff]
      %v255 = vld [vmem:[%s220 + $0xd8] sm:$0xff]
      %v256 = vld [vmem:[%s220 + $0xe0] sm:$0xff]
      %v257 = vld [vmem:[%s220 + $0xe8] sm:$0xff]
      %v258 = vld [vmem:[%s220 + $0xf0] sm:$0xff]
      %v259 = vld [vmem:[%s220 + $0xf8] sm:$0xff]
      %v260 = vld [vmem:[%s1] sm:$0xff]
      %v261 = vld [vmem:[%s1 + $0x8] sm:$0xff]
      %v262 = vld [vmem:[%s1 + $0x10] sm:$0xff]
      %v263 = vld [vmem:[%s1 + $0x18] sm:$0xff]
      %v264 = vld [vmem:[%s2] sm:$0x1]
      %v266 = vlaneseq
      %v267 = vshrl.u32 %v266, 7
      %v268 = vsub.s32 0, %v267
      %v269 = vrot.slane %v264, %v268
      %vm271 = vcmask 261120
      %v273 = vsel %vm271, %v228, 0
      %v276 = vsel %vm271, %v229, 0
      %v279 = vsel %vm271, %v230, 0
      %v282 = vsel %vm271, %v231, 0
      %v285 = vsel %vm271, %v232, 0
      %v288 = vsel %vm271, %v233, 0
      %v291 = vsel %vm271, %v234, 0
      %v294 = vsel %vm271, %v235, 0
      %v297 = vsel %vm271, %v236, 0
      %v300 = vsel %vm271, %v237, 0
      %v303 = vsel %vm271, %v238, 0
      %v306 = vsel %vm271, %v239, 0
      %v309 = vsel %vm271, %v240, 0
      %v312 = vsel %vm271, %v241, 0
      %v315 = vsel %vm271, %v242, 0
      %v318 = vsel %vm271, %v243, 0
      %v321 = vsel %vm271, %v244, 0
      %v324 = vsel %vm271, %v245, 0
      %v327 = vsel %vm271, %v246, 0
      %v330 = vsel %vm271, %v247, 0
      %v333 = vsel %vm271, %v248, 0
      %v336 = vsel %vm271, %v249, 0
      %v339 = vsel %vm271, %v250, 0
      %v342 = vsel %vm271, %v251, 0
      %v345 = vsel %vm271, %v252, 0
      %v348 = vsel %vm271, %v253, 0
      %v351 = vsel %vm271, %v254, 0
      %v354 = vsel %vm271, %v255, 0
      %v357 = vsel %vm271, %v256, 0
      %v360 = vsel %vm271, %v257, 0
      %v363 = vsel %vm271, %v258, 0
      %v366 = vsel %vm271, %v259, 0
      %368 = vmatprep.subr.mxu0 0.0
      %369 = vmatpush1.msra.mxu0 0.0
      %370 = vmatprep.subr.mxu0 0.0
      %371 = vmatpush1.msra.mxu0 0.0
      %372 = vmatprep.subr.mxu0 0.0
      %373 = vmatpush1.msra.mxu0 0.0
      %374 = vmatprep.subr.mxu0 0.0
      %375 = vmatpush1.msra.mxu0 0.0
      %376 = vmatprep.subr.mxu0 0.0
      %377 = vmatpush1.msra.mxu0 0.0
      %378 = vmatprep.subr.mxu0 0.0
      %379 = vmatpush1.msra.mxu0 0.0
      %380 = vmatprep.subr.mxu0 0.0
      %381 = vmatpush1.msra.mxu0 0.0
      %382 = vmatprep.subr.mxu0 0.0
      %383 = vmatpush1.msra.mxu0 0.0
      %384 = vmatprep.subr.mxu0 0.0
      %385 = vmatpush1.msra.mxu0 0.0
      %386 = vmatprep.subr.mxu0 0.0
      %387 = vmatpush1.msra.mxu0 0.0
      %388 = vmatprep.subr.mxu0 0.0
      %389 = vmatpush1.msra.mxu0 0.0
      %390 = vmatprep.subr.mxu0 0.0
      %391 = vmatpush1.msra.mxu0 0.0
      %392 = vmatprep.subr.mxu0 0.0
      %393 = vmatpush1.msra.mxu0 %v263
      %394 = vmatprep.subr.mxu0 0.0
      %395 = vmatpush1.msra.mxu0 %v262
      %396 = vmatprep.subr.mxu0 0.0
      %397 = vmatpush1.msra.mxu0 %v261
      %398 = vmatprep.subr.mxu0 0.0
      %399 = vmatpush1.msra.mxu0 %v260
      %400 = vmatprep.subr.mxu0 0.0
      %401 = vmatpush2.msra.mxu0 0.0
      %402 = vmatprep.subr.mxu0 0.0
      %403 = vmatpush2.msra.mxu0 0.0
      %404 = vmatprep.subr.mxu0 0.0
      %405 = vmatpush2.msra.mxu0 0.0
      %406 = vmatprep.subr.mxu0 0.0
      %407 = vmatpush2.msra.mxu0 0.0
      %408 = vmatprep.subr.mxu0 0.0
      %409 = vmatpush2.msra.mxu0 0.0
      %410 = vmatprep.subr.mxu0 0.0
      %411 = vmatpush2.msra.mxu0 0.0
      %412 = vmatprep.subr.mxu0 0.0
      %413 = vmatpush2.msra.mxu0 0.0
      %414 = vmatprep.subr.mxu0 0.0
      %415 = vmatpush2.msra.mxu0 0.0
      %416 = vmatprep.subr.mxu0 0.0
      %417 = vmatpush2.msra.mxu0 0.0
      %418 = vmatprep.subr.mxu0 0.0
      %419 = vmatpush2.msra.mxu0 0.0
      %420 = vmatprep.subr.mxu0 0.0
      %421 = vmatpush2.msra.mxu0 0.0
      %422 = vmatprep.subr.mxu0 0.0
      %423 = vmatpush2.msra.mxu0 0.0
      %424 = vmatprep.subr.mxu0 0.0
      %425 = vmatpush2.msra.mxu0 0.0
      %426 = vmatprep.subr.mxu0 0.0
      %427 = vmatpush2.msra.mxu0 0.0
      %428 = vmatprep.subr.mxu0 0.0
      %429 = vmatpush2.msra.mxu0 0.0
      %430 = vmatprep.subr.mxu0 0.0
      %431 = vmatpush2.msra.mxu0 0.0
      %432 = vmatprep.mubr.f32.mxu0 0.0
      %433 = vmatmul.mubr.f32.gmra.mxu0 %v273
      %v434 = vpop.f32.mrf.mxu0
      %v435 = vadd.f32 %v269, %v434
      %v436 = vpop.f32.mrf.mxu0
      %437 = vmatprep.mubr.f32.mxu0 0.0
      %438 = vmatmul.mubr.f32.gmra.mxu0 %v276
      %v439 = vpop.f32.mrf.mxu0
      %v440 = vadd.f32 %v269, %v439
      %v441 = vpop.f32.mrf.mxu0
      %442 = vmatprep.mubr.f32.mxu0 0.0
      %443 = vmatmul.mubr.f32.gmra.mxu0 %v279
      %v444 = vpop.f32.mrf.mxu0
      %v445 = vadd.f32 %v269, %v444
      %v446 = vpop.f32.mrf.mxu0
      %447 = vmatprep.mubr.f32.mxu0 0.0
      %448 = vmatmul.mubr.f32.gmra.mxu0 %v282
      %v449 = vpop.f32.mrf.mxu0
      %v450 = vadd.f32 %v269, %v449
      %v451 = vpop.f32.mrf.mxu0
      %452 = vmatprep.mubr.f32.mxu0 0.0
      %453 = vmatmul.mubr.f32.gmra.mxu0 %v285
      %v454 = vpop.f32.mrf.mxu0
      %v455 = vadd.f32 %v269, %v454
      %v456 = vpop.f32.mrf.mxu0
      %457 = vmatprep.mubr.f32.mxu0 0.0
      %458 = vmatmul.mubr.f32.gmra.mxu0 %v288
      %v459 = vpop.f32.mrf.mxu0
      %v460 = vadd.f32 %v269, %v459
      %v461 = vpop.f32.mrf.mxu0
      %462 = vmatprep.mubr.f32.mxu0 0.0
      %463 = vmatmul.mubr.f32.gmra.mxu0 %v291
      %v464 = vpop.f32.mrf.mxu0
      %v465 = vadd.f32 %v269, %v464
      %v466 = vpop.f32.mrf.mxu0
      %467 = vmatprep.mubr.f32.mxu0 0.0
      %468 = vmatmul.mubr.f32.gmra.mxu0 %v294
      %v469 = vpop.f32.mrf.mxu0
      %v470 = vadd.f32 %v269, %v469
      %v471 = vpop.f32.mrf.mxu0
      %472 = vmatprep.mubr.f32.mxu0 0.0
      %473 = vmatmul.mubr.f32.gmra.mxu0 %v297
      %v474 = vpop.f32.mrf.mxu0
      %v475 = vadd.f32 %v269, %v474
      %v476 = vpop.f32.mrf.mxu0
      %477 = vmatprep.mubr.f32.mxu0 0.0
      %478 = vmatmul.mubr.f32.gmra.mxu0 %v300
      %v479 = vpop.f32.mrf.mxu0
      %v480 = vadd.f32 %v269, %v479
      %v481 = vpop.f32.mrf.mxu0
      %482 = vmatprep.mubr.f32.mxu0 0.0
      %483 = vmatmul.mubr.f32.gmra.mxu0 %v303
      %v484 = vpop.f32.mrf.mxu0
      %v485 = vadd.f32 %v269, %v484
      %v486 = vpop.f32.mrf.mxu0
      %487 = vmatprep.mubr.f32.mxu0 0.0
      %488 = vmatmul.mubr.f32.gmra.mxu0 %v306
      %v489 = vpop.f32.mrf.mxu0
      %v490 = vadd.f32 %v269, %v489
      %v491 = vpop.f32.mrf.mxu0
      %492 = vmatprep.mubr.f32.mxu0 0.0
      %493 = vmatmul.mubr.f32.gmra.mxu0 %v309
      %v494 = vpop.f32.mrf.mxu0
      %v495 = vadd.f32 %v269, %v494
      %v496 = vpop.f32.mrf.mxu0
      %497 = vmatprep.mubr.f32.mxu0 0.0
      %498 = vmatmul.mubr.f32.gmra.mxu0 %v312
      %v499 = vpop.f32.mrf.mxu0
      %v500 = vadd.f32 %v269, %v499
      %v501 = vpop.f32.mrf.mxu0
      %502 = vmatprep.mubr.f32.mxu0 0.0
      %503 = vmatmul.mubr.f32.gmra.mxu0 %v315
      %v504 = vpop.f32.mrf.mxu0
      %v505 = vadd.f32 %v269, %v504
      %v506 = vpop.f32.mrf.mxu0
      %507 = vmatprep.mubr.f32.mxu0 0.0
      %508 = vmatmul.mubr.f32.gmra.mxu0 %v318
      %v509 = vpop.f32.mrf.mxu0
      %v510 = vadd.f32 %v269, %v509
      %v511 = vpop.f32.mrf.mxu0
      %512 = vmatprep.mubr.f32.mxu0 0.0
      %513 = vmatmul.mubr.f32.gmra.mxu0 %v321
      %v514 = vpop.f32.mrf.mxu0
      %v515 = vadd.f32 %v269, %v514
      %v516 = vpop.f32.mrf.mxu0
      %517 = vmatprep.mubr.f32.mxu0 0.0
      %518 = vmatmul.mubr.f32.gmra.mxu0 %v324
      %v519 = vpop.f32.mrf.mxu0
      %v520 = vadd.f32 %v269, %v519
      %v521 = vpop.f32.mrf.mxu0
      %522 = vmatprep.mubr.f32.mxu0 0.0
      %523 = vmatmul.mubr.f32.gmra.mxu0 %v327
      %v524 = vpop.f32.mrf.mxu0
      %v525 = vadd.f32 %v269, %v524
      %v526 = vpop.f32.mrf.mxu0
      %527 = vmatprep.mubr.f32.mxu0 0.0
      %528 = vmatmul.mubr.f32.gmra.mxu0 %v330
      %v529 = vpop.f32.mrf.mxu0
      %v530 = vadd.f32 %v269, %v529
      %v531 = vpop.f32.mrf.mxu0
      %532 = vmatprep.mubr.f32.mxu0 0.0
      %533 = vmatmul.mubr.f32.gmra.mxu0 %v333
      %v534 = vpop.f32.mrf.mxu0
      %v535 = vadd.f32 %v269, %v534
      %v536 = vpop.f32.mrf.mxu0
      %537 = vmatprep.mubr.f32.mxu0 0.0
      %538 = vmatmul.mubr.f32.gmra.mxu0 %v336
      %v539 = vpop.f32.mrf.mxu0
      %v540 = vadd.f32 %v269, %v539
      %v541 = vpop.f32.mrf.mxu0
      %542 = vmatprep.mubr.f32.mxu0 0.0
      %543 = vmatmul.mubr.f32.gmra.mxu0 %v339
      %v544 = vpop.f32.mrf.mxu0
      %v545 = vadd.f32 %v269, %v544
      %v546 = vpop.f32.mrf.mxu0
      %547 = vmatprep.mubr.f32.mxu0 0.0
      %548 = vmatmul.mubr.f32.gmra.mxu0 %v342
      %v549 = vpop.f32.mrf.mxu0
      %v550 = vadd.f32 %v269, %v549
      %v551 = vpop.f32.mrf.mxu0
      %552 = vmatprep.mubr.f32.mxu0 0.0
      %553 = vmatmul.mubr.f32.gmra.mxu0 %v345
      %v554 = vpop.f32.mrf.mxu0
      %v555 = vadd.f32 %v269, %v554
      %v556 = vpop.f32.mrf.mxu0
      %557 = vmatprep.mubr.f32.mxu0 0.0
      %558 = vmatmul.mubr.f32.gmra.mxu0 %v348
      %v559 = vpop.f32.mrf.mxu0
      %v560 = vadd.f32 %v269, %v559
      %v561 = vpop.f32.mrf.mxu0
      %562 = vmatprep.mubr.f32.mxu0 0.0
      %563 = vmatmul.mubr.f32.gmra.mxu0 %v351
      %v564 = vpop.f32.mrf.mxu0
      %v565 = vadd.f32 %v269, %v564
      %v566 = vpop.f32.mrf.mxu0
      %567 = vmatprep.mubr.f32.mxu0 0.0
      %568 = vmatmul.mubr.f32.gmra.mxu0 %v354
      %v569 = vpop.f32.mrf.mxu0
      %v570 = vadd.f32 %v269, %v569
      %v571 = vpop.f32.mrf.mxu0
      %572 = vmatprep.mubr.f32.mxu0 0.0
      %573 = vmatmul.mubr.f32.gmra.mxu0 %v357
      %v574 = vpop.f32.mrf.mxu0
      %v575 = vadd.f32 %v269, %v574
      %v576 = vpop.f32.mrf.mxu0
      %577 = vmatprep.mubr.f32.mxu0 0.0
      %578 = vmatmul.mubr.f32.gmra.mxu0 %v360
      %v579 = vpop.f32.mrf.mxu0
      %v580 = vadd.f32 %v269, %v579
      %v581 = vpop.f32.mrf.mxu0
      %582 = vmatprep.mubr.f32.mxu0 0.0
      %583 = vmatmul.mubr.f32.gmra.mxu0 %v363
      %v584 = vpop.f32.mrf.mxu0
      %v585 = vadd.f32 %v269, %v584
      %v586 = vpop.f32.mrf.mxu0
      %587 = vmatprep.mubr.f32.mxu0 0.0
      %588 = vmatmul.mubr.f32.gmra.mxu0 %v366
      %v589 = vpop.f32.mrf.mxu0
      %v590 = vadd.f32 %v269, %v589
      %v591 = vpop.f32.mrf.mxu0
      %592 = vdwg.mxu0
      %v593 = vtanh.pop %v435
      %v594 = vtanh.pop %v440
      %v595 = vtanh.pop %v445
      %v596 = vtanh.pop %v450
      %v597 = vtanh.pop %v455
      %v598 = vtanh.pop %v460
      %v599 = vtanh.pop %v465
      %v600 = vtanh.pop %v470
      %v601 = vtanh.pop %v475
      %v602 = vtanh.pop %v480
      %v603 = vtanh.pop %v485
      %v604 = vtanh.pop %v490
      %v605 = vtanh.pop %v495
      %v606 = vtanh.pop %v500
      %v607 = vtanh.pop %v505
      %v608 = vtanh.pop %v510
      %v609 = vtanh.pop %v515
      %v610 = vtanh.pop %v520
      %v611 = vtanh.pop %v525
      %v612 = vtanh.pop %v530
      %v613 = vtanh.pop %v535
      %v614 = vtanh.pop %v540
      %v615 = vtanh.pop %v545
      %v616 = vtanh.pop %v550
      %v617 = vtanh.pop %v555
      %v618 = vtanh.pop %v560
      %v619 = vtanh.pop %v565
      %v620 = vtanh.pop %v570
      %v621 = vtanh.pop %v575
      %v622 = vtanh.pop %v580
      %v623 = vtanh.pop %v585
      %v624 = vtanh.pop %v590
      %v625 = vld [vmem:[%s3] sm:$0xff]
      %v626 = vld [vmem:[%s3 + $0x8] sm:$0xff]
      %v627 = vld [vmem:[%s3 + $0x10] sm:$0xff]
      %v628 = vld [vmem:[%s3 + $0x18] sm:$0xff]
      %v629 = vld [vmem:[%s3 + $0x20] sm:$0xff]
      %v630 = vld [vmem:[%s3 + $0x28] sm:$0xff]
      %v631 = vld [vmem:[%s3 + $0x30] sm:$0xff]
      %v632 = vld [vmem:[%s3 + $0x38] sm:$0xff]
      %v633 = vld [vmem:[%s3 + $0x40] sm:$0xff]
      %v634 = vld [vmem:[%s3 + $0x48] sm:$0xff]
      %v635 = vld [vmem:[%s3 + $0x50] sm:$0xff]
      %v636 = vld [vmem:[%s3 + $0x58] sm:$0xff]
      %v637 = vld [vmem:[%s3 + $0x60] sm:$0xff]
      %v638 = vld [vmem:[%s3 + $0x68] sm:$0xff]
      %v639 = vld [vmem:[%s3 + $0x70] sm:$0xff]
      %v640 = vld [vmem:[%s3 + $0x78] sm:$0xff]
      %v641 = vld [vmem:[%s4] sm:$0x1]
      %v643 = vlaneseq
      %v644 = vshrl.u32 %v643, 7
      %v645 = vsub.s32 0, %v644
      %v646 = vrot.slane %v641, %v645
      %648 = vmatprep.subr.mxu0 0.0
      %649 = vmatpush1.msra.mxu0 %v640
      %650 = vmatprep.subr.mxu0 0.0
      %651 = vmatpush1.msra.mxu0 %v639
      %652 = vmatprep.subr.mxu0 0.0
      %653 = vmatpush1.msra.mxu0 %v638
      %654 = vmatprep.subr.mxu0 0.0
      %655 = vmatpush1.msra.mxu0 %v637
      %656 = vmatprep.subr.mxu0 0.0
      %657 = vmatpush1.msra.mxu0 %v636
      %658 = vmatprep.subr.mxu0 0.0
      %659 = vmatpush1.msra.mxu0 %v635
      %660 = vmatprep.subr.mxu0 0.0
      %661 = vmatpush1.msra.mxu0 %v634
      %662 = vmatprep.subr.mxu0 0.0
      %663 = vmatpush1.msra.mxu0 %v633
      %664 = vmatprep.subr.mxu0 0.0
      %665 = vmatpush1.msra.mxu0 %v632
      %666 = vmatprep.subr.mxu0 0.0
      %667 = vmatpush1.msra.mxu0 %v631
      %668 = vmatprep.subr.mxu0 0.0
      %669 = vmatpush1.msra.mxu0 %v630
      %670 = vmatprep.subr.mxu0 0.0
      %671 = vmatpush1.msra.mxu0 %v629
      %672 = vmatprep.subr.mxu0 0.0
      %673 = vmatpush1.msra.mxu0 %v628
      %674 = vmatprep.subr.mxu0 0.0
      %675 = vmatpush1.msra.mxu0 %v627
      %676 = vmatprep.subr.mxu0 0.0
      %677 = vmatpush1.msra.mxu0 %v626
      %678 = vmatprep.subr.mxu0 0.0
      %679 = vmatpush1.msra.mxu0 %v625
      %680 = vmatprep.subr.mxu0 0.0
      %681 = vmatpush2.msra.mxu0 0.0
      %682 = vmatprep.subr.mxu0 0.0
      %683 = vmatpush2.msra.mxu0 0.0
      %684 = vmatprep.subr.mxu0 0.0
      %685 = vmatpush2.msra.mxu0 0.0
      %686 = vmatprep.subr.mxu0 0.0
      %687 = vmatpush2.msra.mxu0 0.0
      %688 = vmatprep.subr.mxu0 0.0
      %689 = vmatpush2.msra.mxu0 0.0
      %690 = vmatprep.subr.mxu0 0.0
      %691 = vmatpush2.msra.mxu0 0.0
      %692 = vmatprep.subr.mxu0 0.0
      %693 = vmatpush2.msra.mxu0 0.0
      %694 = vmatprep.subr.mxu0 0.0
      %695 = vmatpush2.msra.mxu0 0.0
      %696 = vmatprep.subr.mxu0 0.0
      %697 = vmatpush2.msra.mxu0 0.0
      %698 = vmatprep.subr.mxu0 0.0
      %699 = vmatpush2.msra.mxu0 0.0
      %700 = vmatprep.subr.mxu0 0.0
      %701 = vmatpush2.msra.mxu0 0.0
      %702 = vmatprep.subr.mxu0 0.0
      %703 = vmatpush2.msra.mxu0 0.0
      %704 = vmatprep.subr.mxu0 0.0
      %705 = vmatpush2.msra.mxu0 0.0
      %706 = vmatprep.subr.mxu0 0.0
      %707 = vmatpush2.msra.mxu0 0.0
      %708 = vmatprep.subr.mxu0 0.0
      %709 = vmatpush2.msra.mxu0 0.0
      %710 = vmatprep.subr.mxu0 0.0
      %711 = vmatpush2.msra.mxu0 0.0
      %712 = vmatprep.mubr.f32.mxu0 0.0
      %713 = vmatmul.mubr.f32.gmra.mxu0 %v593
      %v714 = vpop.f32.mrf.mxu0
      %v715 = vadd.f32 %v646, %v714
      %v716 = vpop.f32.mrf.mxu0
      %717 = vmatprep.mubr.f32.mxu0 0.0
      %718 = vmatmul.mubr.f32.gmra.mxu0 %v594
      %v719 = vpop.f32.mrf.mxu0
      %v720 = vadd.f32 %v646, %v719
      %v721 = vpop.f32.mrf.mxu0
      %722 = vmatprep.mubr.f32.mxu0 0.0
      %723 = vmatmul.mubr.f32.gmra.mxu0 %v595
      %v724 = vpop.f32.mrf.mxu0
      %v725 = vadd.f32 %v646, %v724
      %v726 = vpop.f32.mrf.mxu0
      %727 = vmatprep.mubr.f32.mxu0 0.0
      %728 = vmatmul.mubr.f32.gmra.mxu0 %v596
      %v729 = vpop.f32.mrf.mxu0
      %v730 = vadd.f32 %v646, %v729
      %v731 = vpop.f32.mrf.mxu0
      %732 = vmatprep.mubr.f32.mxu0 0.0
      %733 = vmatmul.mubr.f32.gmra.mxu0 %v597
      %v734 = vpop.f32.mrf.mxu0
      %v735 = vadd.f32 %v646, %v734
      %v736 = vpop.f32.mrf.mxu0
      %737 = vmatprep.mubr.f32.mxu0 0.0
      %738 = vmatmul.mubr.f32.gmra.mxu0 %v598
      %v739 = vpop.f32.mrf.mxu0
      %v740 = vadd.f32 %v646, %v739
      %v741 = vpop.f32.mrf.mxu0
      %742 = vmatprep.mubr.f32.mxu0 0.0
      %743 = vmatmul.mubr.f32.gmra.mxu0 %v599
      %v744 = vpop.f32.mrf.mxu0
      %v745 = vadd.f32 %v646, %v744
      %v746 = vpop.f32.mrf.mxu0
      %747 = vmatprep.mubr.f32.mxu0 0.0
      %748 = vmatmul.mubr.f32.gmra.mxu0 %v600
      %v749 = vpop.f32.mrf.mxu0
      %v750 = vadd.f32 %v646, %v749
      %v751 = vpop.f32.mrf.mxu0
      %752 = vmatprep.mubr.f32.mxu0 0.0
      %753 = vmatmul.mubr.f32.gmra.mxu0 %v601
      %v754 = vpop.f32.mrf.mxu0
      %v755 = vadd.f32 %v646, %v754
      %v756 = vpop.f32.mrf.mxu0
      %757 = vmatprep.mubr.f32.mxu0 0.0
      %758 = vmatmul.mubr.f32.gmra.mxu0 %v602
      %v759 = vpop.f32.mrf.mxu0
      %v760 = vadd.f32 %v646, %v759
      %v761 = vpop.f32.mrf.mxu0
      %762 = vmatprep.mubr.f32.mxu0 0.0
      %763 = vmatmul.mubr.f32.gmra.mxu0 %v603
      %v764 = vpop.f32.mrf.mxu0
      %v765 = vadd.f32 %v646, %v764
      %v766 = vpop.f32.mrf.mxu0
      %767 = vmatprep.mubr.f32.mxu0 0.0
      %768 = vmatmul.mubr.f32.gmra.mxu0 %v604
      %v769 = vpop.f32.mrf.mxu0
      %v770 = vadd.f32 %v646, %v769
      %v771 = vpop.f32.mrf.mxu0
      %772 = vmatprep.mubr.f32.mxu0 0.0
      %773 = vmatmul.mubr.f32.gmra.mxu0 %v605
      %v774 = vpop.f32.mrf.mxu0
      %v775 = vadd.f32 %v646, %v774
      %v776 = vpop.f32.mrf.mxu0
      %777 = vmatprep.mubr.f32.mxu0 0.0
      %778 = vmatmul.mubr.f32.gmra.mxu0 %v606
      %v779 = vpop.f32.mrf.mxu0
      %v780 = vadd.f32 %v646, %v779
      %v781 = vpop.f32.mrf.mxu0
      %782 = vmatprep.mubr.f32.mxu0 0.0
      %783 = vmatmul.mubr.f32.gmra.mxu0 %v607
      %v784 = vpop.f32.mrf.mxu0
      %v785 = vadd.f32 %v646, %v784
      %v786 = vpop.f32.mrf.mxu0
      %787 = vmatprep.mubr.f32.mxu0 0.0
      %788 = vmatmul.mubr.f32.gmra.mxu0 %v608
      %v789 = vpop.f32.mrf.mxu0
      %v790 = vadd.f32 %v646, %v789
      %v791 = vpop.f32.mrf.mxu0
      %792 = vmatprep.mubr.f32.mxu0 0.0
      %793 = vmatmul.mubr.f32.gmra.mxu0 %v609
      %v794 = vpop.f32.mrf.mxu0
      %v795 = vadd.f32 %v646, %v794
      %v796 = vpop.f32.mrf.mxu0
      %797 = vmatprep.mubr.f32.mxu0 0.0
      %798 = vmatmul.mubr.f32.gmra.mxu0 %v610
      %v799 = vpop.f32.mrf.mxu0
      %v800 = vadd.f32 %v646, %v799
      %v801 = vpop.f32.mrf.mxu0
      %802 = vmatprep.mubr.f32.mxu0 0.0
      %803 = vmatmul.mubr.f32.gmra.mxu0 %v611
      %v804 = vpop.f32.mrf.mxu0
      %v805 = vadd.f32 %v646, %v804
      %v806 = vpop.f32.mrf.mxu0
      %807 = vmatprep.mubr.f32.mxu0 0.0
      %808 = vmatmul.mubr.f32.gmra.mxu0 %v612
      %v809 = vpop.f32.mrf.mxu0
      %v810 = vadd.f32 %v646, %v809
      %v811 = vpop.f32.mrf.mxu0
      %812 = vmatprep.mubr.f32.mxu0 0.0
      %813 = vmatmul.mubr.f32.gmra.mxu0 %v613
      %v814 = vpop.f32.mrf.mxu0
      %v815 = vadd.f32 %v646, %v814
      %v816 = vpop.f32.mrf.mxu0
      %817 = vmatprep.mubr.f32.mxu0 0.0
      %818 = vmatmul.mubr.f32.gmra.mxu0 %v614
      %v819 = vpop.f32.mrf.mxu0
      %v820 = vadd.f32 %v646, %v819
      %v821 = vpop.f32.mrf.mxu0
      %822 = vmatprep.mubr.f32.mxu0 0.0
      %823 = vmatmul.mubr.f32.gmra.mxu0 %v615
      %v824 = vpop.f32.mrf.mxu0
      %v825 = vadd.f32 %v646, %v824
      %v826 = vpop.f32.mrf.mxu0
      %827 = vmatprep.mubr.f32.mxu0 0.0
      %828 = vmatmul.mubr.f32.gmra.mxu0 %v616
      %v829 = vpop.f32.mrf.mxu0
      %v830 = vadd.f32 %v646, %v829
      %v831 = vpop.f32.mrf.mxu0
      %832 = vmatprep.mubr.f32.mxu0 0.0
      %833 = vmatmul.mubr.f32.gmra.mxu0 %v617
      %v834 = vpop.f32.mrf.mxu0
      %v835 = vadd.f32 %v646, %v834
      %v836 = vpop.f32.mrf.mxu0
      %837 = vmatprep.mubr.f32.mxu0 0.0
      %838 = vmatmul.mubr.f32.gmra.mxu0 %v618
      %v839 = vpop.f32.mrf.mxu0
      %v840 = vadd.f32 %v646, %v839
      %v841 = vpop.f32.mrf.mxu0
      %842 = vmatprep.mubr.f32.mxu0 0.0
      %843 = vmatmul.mubr.f32.gmra.mxu0 %v619
      %v844 = vpop.f32.mrf.mxu0
      %v845 = vadd.f32 %v646, %v844
      %v846 = vpop.f32.mrf.mxu0
      %847 = vmatprep.mubr.f32.mxu0 0.0
      %848 = vmatmul.mubr.f32.gmra.mxu0 %v620
      %v849 = vpop.f32.mrf.mxu0
      %v850 = vadd.f32 %v646, %v849
      %v851 = vpop.f32.mrf.mxu0
      %852 = vmatprep.mubr.f32.mxu0 0.0
      %853 = vmatmul.mubr.f32.gmra.mxu0 %v621
      %v854 = vpop.f32.mrf.mxu0
      %v855 = vadd.f32 %v646, %v854
      %v856 = vpop.f32.mrf.mxu0
      %857 = vmatprep.mubr.f32.mxu0 0.0
      %858 = vmatmul.mubr.f32.gmra.mxu0 %v622
      %v859 = vpop.f32.mrf.mxu0
      %v860 = vadd.f32 %v646, %v859
      %v861 = vpop.f32.mrf.mxu0
      %862 = vmatprep.mubr.f32.mxu0 0.0
      %863 = vmatmul.mubr.f32.gmra.mxu0 %v623
      %v864 = vpop.f32.mrf.mxu0
      %v865 = vadd.f32 %v646, %v864
      %v866 = vpop.f32.mrf.mxu0
      %867 = vmatprep.mubr.f32.mxu0 0.0
      %868 = vmatmul.mubr.f32.gmra.mxu0 %v624
      %v869 = vpop.f32.mrf.mxu0
      %v870 = vadd.f32 %v646, %v869
      %v871 = vpop.f32.mrf.mxu0
      %872 = vdwg.mxu0
      %v873 = vtanh.pop %v715
      %v874 = vtanh.pop %v720
      %v875 = vtanh.pop %v725
      %v876 = vtanh.pop %v730
      %v877 = vtanh.pop %v735
      %v878 = vtanh.pop %v740
      %v879 = vtanh.pop %v745
      %v880 = vtanh.pop %v750
      %v881 = vtanh.pop %v755
      %v882 = vtanh.pop %v760
      %v883 = vtanh.pop %v765
      %v884 = vtanh.pop %v770
      %v885 = vtanh.pop %v775
      %v886 = vtanh.pop %v780
      %v887 = vtanh.pop %v785
      %v888 = vtanh.pop %v790
      %v889 = vtanh.pop %v795
      %v890 = vtanh.pop %v800
      %v891 = vtanh.pop %v805
      %v892 = vtanh.pop %v810
      %v893 = vtanh.pop %v815
      %v894 = vtanh.pop %v820
      %v895 = vtanh.pop %v825
      %v896 = vtanh.pop %v830
      %v897 = vtanh.pop %v835
      %v898 = vtanh.pop %v840
      %v899 = vtanh.pop %v845
      %v900 = vtanh.pop %v850
      %v901 = vtanh.pop %v855
      %v902 = vtanh.pop %v860
      %v903 = vtanh.pop %v865
      %v904 = vtanh.pop %v870
      %905 = vst [vmem:[%s226] sm:$0xff] %v873
      %906 = vst [vmem:[%s226 + $0x8] sm:$0xff] %v874
      %907 = vst [vmem:[%s226 + $0x10] sm:$0xff] %v875
      %908 = vst [vmem:[%s226 + $0x18] sm:$0xff] %v876
      %909 = vst [vmem:[%s226 + $0x20] sm:$0xff] %v877
      %910 = vst [vmem:[%s226 + $0x28] sm:$0xff] %v878
      %911 = vst [vmem:[%s226 + $0x30] sm:$0xff] %v879
      %912 = vst [vmem:[%s226 + $0x38] sm:$0xff] %v880
      %913 = vst [vmem:[%s226 + $0x40] sm:$0xff] %v881
      %914 = vst [vmem:[%s226 + $0x48] sm:$0xff] %v882
      %915 = vst [vmem:[%s226 + $0x50] sm:$0xff] %v883
      %916 = vst [vmem:[%s226 + $0x58] sm:$0xff] %v884
      %917 = vst [vmem:[%s226 + $0x60] sm:$0xff] %v885
      %918 = vst [vmem:[%s226 + $0x68] sm:$0xff] %v886
      %919 = vst [vmem:[%s226 + $0x70] sm:$0xff] %v887
      %920 = vst [vmem:[%s226 + $0x78] sm:$0xff] %v888
      %921 = vst [vmem:[%s226 + $0x80] sm:$0xff] %v889
      %922 = vst [vmem:[%s226 + $0x88] sm:$0xff] %v890
      %923 = vst [vmem:[%s226 + $0x90] sm:$0xff] %v891
      %924 = vst [vmem:[%s226 + $0x98] sm:$0xff] %v892
      %925 = vst [vmem:[%s226 + $0xa0] sm:$0xff] %v893
      %926 = vst [vmem:[%s226 + $0xa8] sm:$0xff] %v894
      %927 = vst [vmem:[%s226 + $0xb0] sm:$0xff] %v895
      %928 = vst [vmem:[%s226 + $0xb8] sm:$0xff] %v896
      %929 = vst [vmem:[%s226 + $0xc0] sm:$0xff] %v897
      %930 = vst [vmem:[%s226 + $0xc8] sm:$0xff] %v898
      %931 = vst [vmem:[%s226 + $0xd0] sm:$0xff] %v899
      %932 = vst [vmem:[%s226 + $0xd8] sm:$0xff] %v900
      %933 = vst [vmem:[%s226 + $0xe0] sm:$0xff] %v901
      %934 = vst [vmem:[%s226 + $0xe8] sm:$0xff] %v902
      %935 = vst [vmem:[%s226 + $0xf0] sm:$0xff] %v903
      %936 = vst [vmem:[%s226 + $0xf8] sm:$0xff] %v904
      %s937 = smul.u32 32, %s16
      %p938 = scmp.lt.s32.totalorder %s937, 63
      %s939 = scalar_select %p938, %s937, 63
      %s940 = smul.addr %s939, 8
      %s941 = scalar_lea.vmem %s5, %s940
      // Predicated region
      $region41: #{_ff1_forward_impl.1} parent=39 // pred_check
        %p942 = pneg %p144
      $region42: #{_ff1_forward_impl.1} parent=39 // pred_check_branch
        %944 = sbr.rel (%p942) target = $region44
      $region43: #{_ff1_forward_impl.1} parent=39 // pred_region
        %s945 = smul.u32 32, %s16
      $region44: #{_ff1_forward_impl.1} parent=39 // pred_fallthru
        _
    $region40: #{_ff1_forward_impl.1} parent=5 // pred_fallthru
      _
    %p946 = scmp.le.s32.totalorder 2, %s11
    // Predicated region
    $region45: #{_ff1_forward_impl.1} parent=5 // pred_check
      %p947 = pneg %p946
    $region46: #{_ff1_forward_impl.1} parent=5 // pred_check_branch
      %949 = sbr.rel (%p947) target = $region48
    $region47: #{_ff1_forward_impl.1} parent=5 // pred_region
      %s950 = ssub.s32 %s11, 2
      // Predicated region
      $region49: #{_ff1_forward_impl.1} parent=47 // pred_check
        %p951 = pneg %p150
      $region50: #{_ff1_forward_impl.1} parent=47 // pred_check_branch
        %953 = sbr.rel (%p951) target = $region52
      $region51: #{_ff1_forward_impl.1} parent=47 // pred_region
        %s954 = smul.u32 32, %s17
        %p955 = scmp.lt.s32.totalorder %s954, 63
        %s956 = scalar_select %p955, %s954, 63
        %s957 = smul.addr %s956, 8
        %s958 = scalar_lea.vmem %s5, %s957
      $region52: #{_ff1_forward_impl.1} parent=47 // pred_fallthru
        _
    $region48: #{_ff1_forward_impl.1} parent=5 // pred_fallthru
      _
  $region6: #{_ff1_forward_impl.1} parent=0 // loop_footer
    %s15 = sadd.s32 1, %s11
  $region7: #{_ff1_forward_impl.1} parent=0 // loop_footer_branch
    %10 = sbr.rel target = $region3
  $region8: #{_ff1_forward_impl.1} parent=0 // loop_exit
    _

</llo_original>
